<compile_context>
chip_gen: v7x
topology: tpu7x:2x2x1
jax: 0.10.0
libtpu: 0.0.40
codegen_flags: <defaults>
</compile_context>

<pallas_src>
import jax
import jax.numpy as jnp
from jax.experimental import pallas as pl

# ---- model hyper-parameters (small, consistent with the module's forward) ----
B = 2            # batch
S = 8            # sequence length
H = 32           # hidden size (stands in for 768)
NUM_HEADS = 2
DH = H // NUM_HEADS
FFN = 4 * H      # feed-forward inner size
VOCAB = 50
NUM_TYPES = 2
NUM_CLASSES = 6

LANE = 128                 # every packed slot starts on a 128-lane boundary
OUT_LANES = LANE           # lane-dense classifier output (first NUM_CLASSES cols valid)

# ---- packed-weight slab layout: (name, width-read-by-kernel), slot i = cols [i*128, ...) ----
MAT_ORDER = (("wqkv", 3 * H), ("wo", H), ("w1", FFN), ("wp", H), ("wc", OUT_LANES))
VEC_ORDER = (("ln_e_g", H), ("ln_e_b", H), ("bqkv", 3 * H), ("bo", H),
             ("ln1_g", H), ("ln1_b", H), ("b1", FFN), ("b2", H),
             ("ln2_g", H), ("ln2_b", H), ("bp", H), ("bc", OUT_LANES))
MAT_SLOT = {name: i for i, (name, _) in enumerate(MAT_ORDER)}
MAT_WIDTH = dict(MAT_ORDER)
VEC_SLOT = {name: i for i, (name, _) in enumerate(VEC_ORDER)}
VEC_WIDTH = dict(VEC_ORDER)
MAT_COLS = len(MAT_ORDER) * LANE        # (H, 640)
VEC_COLS = len(VEC_ORDER) * LANE        # (1, 1536)


# --------------------------- Pallas kernel ---------------------------
def _bert_classifier_kernel(x_ref, bias_ref, mat_ref, w2_ref, vec_ref, out_ref):
    # static, lane-aligned slab slices (zero-cost ref views)
    def mat(name):
        c = MAT_SLOT[name] * LANE
        return mat_ref[:, c:c + MAT_WIDTH[name]]          # (H, width)

    def vec(name):
        c = VEC_SLOT[name] * LANE
        return vec_ref[:, c:c + VEC_WIDTH[name]]          # (1, width)

    def layer_norm(v, g, b):
        m = jnp.mean(v, axis=-1, keepdims=True)
        var = jnp.mean(jnp.square(v - m), axis=-1, keepdims=True)
        return (v - m) * jax.lax.rsqrt(var + 1e-12) * g + b

    def gelu(v):
        return 0.5 * v * (1.0 + jnp.tanh(0.7978845608028654 *
                                         (v + 0.044715 * v * v * v)))

    x = x_ref[...]                                        # (B*S, H) embeddings
    x = layer_norm(x, vec("ln_e_g"), vec("ln_e_b"))       # embedding LayerNorm

    # ---- fused Q/K/V projection: one (B*S, H) @ (H, 3H) MXU push ----
    qkv = jnp.dot(x, mat("wqkv"), preferred_element_type=jnp.float32) + vec("bqkv")
    q = qkv[:, 0 * H:1 * H]     # wq / bq pre-scaled by 1/sqrt(DH) in the wrapper
    k = qkv[:, 1 * H:2 * H]
    v = qkv[:, 2 * H:3 * H]

    # ---- attention over (batch, head); contexts assembled into one (B*S, H) ----
    ctx_rows = []
    for b in range(B):                                    # static unroll (B=2)
        rows = slice(b * S, (b + 1) * S)
        bias_b = bias_ref[b:b + 1, :]                     # (1, S) additive key mask
        heads = []
        for h in range(NUM_HEADS):                        # static unroll (2 heads)
            cols = slice(h * DH, (h + 1) * DH)
            qh, kh, vh = q[rows, cols], k[rows, cols], v[rows, cols]   # (S, DH)
            scores = jnp.dot(qh, kh.T, preferred_element_type=jnp.float32) + bias_b
            p = jnp.exp(scores - jnp.max(scores, axis=-1, keepdims=True))
            p = p * pl.reciprocal(jnp.sum(p, axis=-1, keepdims=True), approx=True)
            heads.append(jnp.dot(p, vh, preferred_element_type=jnp.float32))
        ctx_rows.append(jnp.concatenate(heads, axis=-1))  # (S, H)
    ctx = jnp.concatenate(ctx_rows, axis=0)               # (B*S, H)

    # single full-depth projection: concat(heads) @ Wo
    attn_out = jnp.dot(ctx, mat("wo"), preferred_element_type=jnp.float32) + vec("bo")
    x1 = layer_norm(x + attn_out, vec("ln1_g"), vec("ln1_b"))

    # ---- feed-forward ----
    hfc = gelu(jnp.dot(x1, mat("w1"), preferred_element_type=jnp.float32) + vec("b1"))
    ffn = jnp.dot(hfc, w2_ref[...], preferred_element_type=jnp.float32) + vec("b2")
    x2 = layer_norm(x1 + ffn, vec("ln2_g"), vec("ln2_b"))

    # ---- BERT pooler: tanh(Linear) on each [CLS] row ----
    cls = jnp.concatenate([x2[b * S:b * S + 1, :] for b in range(B)], axis=0)  # (B, H)
    pooled = jnp.tanh(jnp.dot(cls, mat("wp"), preferred_element_type=jnp.float32)
                      + vec("bp"))

    # dropout(dr_rate) is identity at inference time (eval mode) -> no-op

    # ---- classifier head (lane-dense 128-wide output; cols >= NUM_CLASSES are 0) ----
    out_ref[...] = (jnp.dot(pooled, mat("wc"), preferred_element_type=jnp.float32)
                    + vec("bc"))                          # (B, 128)


# --------------------------- weight packing ---------------------------
def _pack_params(params):
    """Pack the 24 small weights into lane-aligned f32 slabs (+ standalone w2)."""
    scale = 1.0 / (DH ** 0.5)

    def to_slot(a):                                       # zero-pad a (R, w) piece to LANE cols
        a = a.astype(jnp.float32)
        return jnp.pad(a, ((0, 0), (0, LANE - a.shape[1])))

    # fused QKV with the attention scale folded into the Q block (weights AND bias)
    wqkv = jnp.concatenate([params["wq"] * scale, params["wk"], params["wv"]], axis=1)
    bqkv = jnp.concatenate([params["bq"] * scale, params["bk"], params["bv"]], axis=1)

    mat_pieces = {"wqkv": wqkv, "wo": params["wo"], "w1": params["w1"],
                  "wp": params["wp"], "wc": params["wc"]}
    vec_pieces = {"ln_e_g": params["ln_e_g"], "ln_e_b": params["ln_e_b"],
                  "bqkv": bqkv, "bo": params["bo"],
                  "ln1_g": params["ln1_g"], "ln1_b": params["ln1_b"],
                  "b1": params["b1"], "b2": params["b2"],
                  "ln2_g": params["ln2_g"], "ln2_b": params["ln2_b"],
                  "bp": params["bp"], "bc": params["bc"]}

    mat_slab = jnp.concatenate([to_slot(mat_pieces[n]) for n, _ in MAT_ORDER], axis=1)
    vec_slab = jnp.concatenate([to_slot(vec_pieces[n]) for n, _ in VEC_ORDER], axis=1)
    w2 = params["w2"].astype(jnp.float32)                 # (FFN, H): different row count
    return mat_slab, vec_slab, w2


# --------------------------- wrapper ---------------------------
def bert_classifier_forward(token_ids, valid_length, segment_ids, params):
    b_, s_ = token_ids.shape

    # gen_attention_mask -> ADDITIVE key bias: 0 where pos < valid_length, else -1e9
    mask = (jnp.arange(s_)[None, :] < valid_length[:, None]).astype(jnp.float32)  # (B, S)
    attn_bias = (mask - 1.0) * 1e9                                                # (B, S)

    # embedding lookup (table gather stays in plain-JAX glue), flattened to (B*S, H)
    emb = (params["word_emb"][token_ids]
           + params["pos_emb"][None, :, :]
           + params["type_emb"][segment_ids]).astype(jnp.float32)                 # (B, S, H)
    x = emb.reshape(b_ * s_, H)

    mat_slab, vec_slab, w2 = _pack_params(params)

    # No grid: single kernel invocation over the whole (tiny) batch. Every operand
    # gets the default whole-array VMEM BlockSpec (total footprint ~120 KB).
    out = pl.pallas_call(
        _bert_classifier_kernel,
        out_shape=jax.ShapeDtypeStruct((b_, OUT_LANES), jnp.float32),
    )(x, attn_bias, mat_slab, w2, vec_slab)

    return out[:, :NUM_CLASSES]                                                   # (B, C)


# --------------------------- reference (pure JAX) ---------------------------
def reference_forward(token_ids, valid_length, segment_ids, params):
    b_, s_ = token_ids.shape
    mask = (jnp.arange(s_)[None, :] < valid_length[:, None]).astype(jnp.float32)
    emb = (params["word_emb"][token_ids] + params["pos_emb"][None]
           + params["type_emb"][segment_ids])

    def ln(v, g, b):
        m = jnp.mean(v, -1, keepdims=True)
        var = jnp.mean(jnp.square(v - m), -1, keepdims=True)
        return (v - m) * jax.lax.rsqrt(var + 1e-12) * g + b

    def gelu(v):
        return 0.5 * v * (1.0 + jnp.tanh(0.7978845608028654 *
                                         (v + 0.044715 * v ** 3)))

    outs = []
    for i in range(b_):
        x = ln(emb[i], params["ln_e_g"], params["ln_e_b"])
        q = x @ params["wq"] + params["bq"]
        k = x @ params["wk"] + params["bk"]
        v = x @ params["wv"] + params["bv"]
        attn = jnp.zeros((s_, H), jnp.float32)
        for h in range(NUM_HEADS):
            sl = slice(h * DH, (h + 1) * DH)
            sc = (q[:, sl] @ k[:, sl].T) / (DH ** 0.5)
            sc = jnp.where(mask[i][None, :] > 0.5, sc, -1e9)
            p = jax.nn.softmax(sc, axis=-1)
            attn = attn + (p @ v[:, sl]) @ params["wo"][sl, :]
        attn = attn + params["bo"]
        x1 = ln(x + attn, params["ln1_g"], params["ln1_b"])
        ffn = gelu(x1 @ params["w1"] + params["b1"]) @ params["w2"] + params["b2"]
        x2 = ln(x1 + ffn, params["ln2_g"], params["ln2_b"])
        pooled = jnp.tanh(x2[0:1] @ params["wp"] + params["bp"])
        outs.append(pooled @ params["wc"] + params["bc"])
    return jnp.concatenate(outs, axis=0)


# --------------------------- params ---------------------------
def init_params(key):
    ks = jax.random.split(key, 12)

    def w(k, shape):
        return (0.02 * jax.random.normal(k, shape)).astype(jnp.float32)

    z = lambda shape: jnp.zeros(shape, jnp.float32)
    o = lambda shape: jnp.ones(shape, jnp.float32)
    return dict(
        word_emb=w(ks[0], (VOCAB, H)),
        pos_emb=w(ks[1], (S, H)),
        type_emb=w(ks[2], (NUM_TYPES, H)),
        ln_e_g=o((1, H)), ln_e_b=z((1, H)),
        wq=w(ks[3], (H, H)), bq=z((1, H)),
        wk=w(ks[4], (H, H)), bk=z((1, H)),
        wv=w(ks[5], (H, H)), bv=z((1, H)),
        wo=w(ks[6], (H, H)), bo=z((1, H)),
        ln1_g=o((1, H)), ln1_b=z((1, H)),
        w1=w(ks[7], (H, FFN)), b1=z((1, FFN)),
        w2=w(ks[8], (FFN, H)), b2=z((1, H)),
        ln2_g=o((1, H)), ln2_b=z((1, H)),
        wp=w(ks[9], (H, H)), bp=z((1, H)),
        wc=w(ks[10], (H, NUM_CLASSES)), bc=z((1, NUM_CLASSES)),
    )


if __name__ == "__main__":
    key = jax.random.PRNGKey(0)
    pkey, tkey = jax.random.split(key)
    params = init_params(pkey)

    token_ids = jax.random.randint(tkey, (B, S), 0, VOCAB, dtype=jnp.int32)
    segment_ids = jnp.zeros((B, S), jnp.int32)
    valid_length = jnp.array([5, S], jnp.int32)

    fwd = jax.jit(bert_classifier_forward)
    logits = fwd(token_ids, valid_length, segment_ids, params)
    jax.block_until_ready(logits)

    assert logits.shape == (B, NUM_CLASSES) and logits.dtype == jnp.float32

    ref = reference_forward(token_ids, valid_length, segment_ids, params)
    assert jnp.allclose(logits, ref, rtol=1e-3, atol=1e-3), (logits, ref)

    print("KERNEL_OK")
</pallas_src>

<mosaic_0001>
module attributes {stable_mosaic.version = 11 : i64} {
  func.func @_bert_classifier_kernel(%arg0: memref<16x32xf32, #tpu.memory_space<vmem>>, %arg1: memref<2x8xf32, #tpu.memory_space<vmem>>, %arg2: memref<32x640xf32, #tpu.memory_space<vmem>>, %arg3: memref<128x32xf32, #tpu.memory_space<vmem>>, %arg4: memref<1x1536xf32, #tpu.memory_space<vmem>>, %arg5: memref<2x128xf32, #tpu.memory_space<vmem>>) attributes {dimension_semantics = [], scalar_prefetch = 0 : i64, scratch_operands = 0 : i64, tpu.core_type = #tpu.core_type<tc>} {
    %c0 = arith.constant 0 : index
    %c0_0 = arith.constant 0 : index
    %0 = vector.load %arg0[%c0, %c0_0] : memref<16x32xf32, #tpu.memory_space<vmem>>, vector<16x32xf32>
    %c0_1 = arith.constant 0 : index
    %c0_2 = arith.constant 0 : index
    %1 = vector.load %arg4[%c0_1, %c0_2] : memref<1x1536xf32, #tpu.memory_space<vmem>>, vector<1x32xf32>
    %c0_3 = arith.constant 0 : index
    %c128 = arith.constant 128 : index
    %2 = vector.load %arg4[%c0_3, %c128] : memref<1x1536xf32, #tpu.memory_space<vmem>>, vector<1x32xf32>
    %cst = arith.constant dense<0.000000e+00> : vector<16xf32>
    %3 = vector.multi_reduction <add>, %0, %cst [1] : vector<16x32xf32> to vector<16xf32>
    %4 = vector.shape_cast %3 : vector<16xf32> to vector<16x1xf32>
    %cst_4 = arith.constant 3.200000e+01 : f32
    %5 = vector.broadcast %cst_4 : f32 to vector<16x1xf32>
    %6 = arith.divf %4, %5 : vector<16x1xf32>
    %7 = vector.broadcast %6 : vector<16x1xf32> to vector<16x32xf32>
    %8 = arith.subf %0, %7 : vector<16x32xf32>
    %9 = arith.mulf %8, %8 : vector<16x32xf32>
    %cst_5 = arith.constant dense<0.000000e+00> : vector<16xf32>
    %10 = vector.multi_reduction <add>, %9, %cst_5 [1] : vector<16x32xf32> to vector<16xf32>
    %11 = vector.shape_cast %10 : vector<16xf32> to vector<16x1xf32>
    %cst_6 = arith.constant 3.200000e+01 : f32
    %12 = vector.broadcast %cst_6 : f32 to vector<16x1xf32>
    %13 = arith.divf %11, %12 : vector<16x1xf32>
    %14 = vector.broadcast %6 : vector<16x1xf32> to vector<16x32xf32>
    %15 = arith.subf %0, %14 : vector<16x32xf32>
    %cst_7 = arith.constant 9.99999996E-13 : f32
    %16 = vector.broadcast %cst_7 : f32 to vector<16x1xf32>
    %17 = arith.addf %13, %16 : vector<16x1xf32>
    %18 = math.rsqrt %17 : vector<16x1xf32>
    %19 = vector.broadcast %18 : vector<16x1xf32> to vector<16x32xf32>
    %20 = arith.mulf %15, %19 : vector<16x32xf32>
    %21 = vector.broadcast %1 : vector<1x32xf32> to vector<16x32xf32>
    %22 = arith.mulf %20, %21 : vector<16x32xf32>
    %23 = vector.broadcast %2 : vector<1x32xf32> to vector<16x32xf32>
    %24 = arith.addf %22, %23 : vector<16x32xf32>
    %c0_8 = arith.constant 0 : index
    %c0_9 = arith.constant 0 : index
    %25 = vector.load %arg2[%c0_8, %c0_9] : memref<32x640xf32, #tpu.memory_space<vmem>>, vector<32x96xf32>
    %cst_10 = arith.constant dense<0.000000e+00> : vector<16x96xf32>
    %26 = tpu.matmul %24, %25, %cst_10 {dimension_numbers = #tpu.dot_dimension_numbers<[1], [0], [0], [1], [0, 0, 1, 1], [], []>} : vector<16x32xf32>, vector<32x96xf32>, vector<16x96xf32> -> vector<16x96xf32>
    %c0_11 = arith.constant 0 : index
    %c256 = arith.constant 256 : index
    %27 = vector.load %arg4[%c0_11, %c256] : memref<1x1536xf32, #tpu.memory_space<vmem>>, vector<1x96xf32>
    %28 = vector.broadcast %27 : vector<1x96xf32> to vector<16x96xf32>
    %29 = arith.addf %26, %28 : vector<16x96xf32>
    %30 = vector.extract_strided_slice %29 {offsets = [0, 0], sizes = [16, 32], strides = [1, 1]} : vector<16x96xf32> to vector<16x32xf32>
    %31 = vector.extract_strided_slice %29 {offsets = [0, 32], sizes = [16, 32], strides = [1, 1]} : vector<16x96xf32> to vector<16x32xf32>
    %32 = vector.extract_strided_slice %29 {offsets = [0, 64], sizes = [16, 32], strides = [1, 1]} : vector<16x96xf32> to vector<16x32xf32>
    %c0_12 = arith.constant 0 : index
    %c0_13 = arith.constant 0 : index
    %33 = vector.load %arg1[%c0_12, %c0_13] : memref<2x8xf32, #tpu.memory_space<vmem>>, vector<1x8xf32>
    %34 = vector.extract_strided_slice %30 {offsets = [0, 0], sizes = [8, 16], strides = [1, 1]} : vector<16x32xf32> to vector<8x16xf32>
    %35 = vector.extract_strided_slice %31 {offsets = [0, 0], sizes = [8, 16], strides = [1, 1]} : vector<16x32xf32> to vector<8x16xf32>
    %36 = vector.extract_strided_slice %32 {offsets = [0, 0], sizes = [8, 16], strides = [1, 1]} : vector<16x32xf32> to vector<8x16xf32>
    %37 = tpu.transpose %35, [1, 0] : vector<8x16xf32> -> vector<16x8xf32>
    %cst_14 = arith.constant dense<0.000000e+00> : vector<8x8xf32>
    %38 = tpu.matmul %34, %37, %cst_14 {dimension_numbers = #tpu.dot_dimension_numbers<[1], [0], [0], [1], [0, 0, 1, 1], [], []>} : vector<8x16xf32>, vector<16x8xf32>, vector<8x8xf32> -> vector<8x8xf32>
    %39 = vector.broadcast %33 : vector<1x8xf32> to vector<8x8xf32>
    %40 = arith.addf %38, %39 : vector<8x8xf32>
    %cst_15 = arith.constant dense<0xFF800000> : vector<8xf32>
    %41 = vector.multi_reduction <maximumf>, %40, %cst_15 [1] : vector<8x8xf32> to vector<8xf32>
    %42 = vector.shape_cast %41 : vector<8xf32> to vector<8x1xf32>
    %43 = vector.broadcast %42 : vector<8x1xf32> to vector<8x8xf32>
    %44 = arith.subf %40, %43 : vector<8x8xf32>
    %45 = math.exp %44 : vector<8x8xf32>
    %cst_16 = arith.constant dense<0.000000e+00> : vector<8xf32>
    %46 = vector.multi_reduction <add>, %45, %cst_16 [1] : vector<8x8xf32> to vector<8xf32>
    %47 = vector.shape_cast %46 : vector<8xf32> to vector<8x1xf32>
    %48 = tpu.reciprocal %47 {approx = true} : vector<8x1xf32> -> vector<8x1xf32>
    %49 = vector.broadcast %48 : vector<8x1xf32> to vector<8x8xf32>
    %50 = arith.mulf %45, %49 : vector<8x8xf32>
    %cst_17 = arith.constant dense<0.000000e+00> : vector<8x16xf32>
    %51 = tpu.matmul %50, %36, %cst_17 {dimension_numbers = #tpu.dot_dimension_numbers<[1], [0], [0], [1], [0, 0, 1, 1], [], []>} : vector<8x8xf32>, vector<8x16xf32>, vector<8x16xf32> -> vector<8x16xf32>
    %52 = vector.extract_strided_slice %30 {offsets = [0, 16], sizes = [8, 16], strides = [1, 1]} : vector<16x32xf32> to vector<8x16xf32>
    %53 = vector.extract_strided_slice %31 {offsets = [0, 16], sizes = [8, 16], strides = [1, 1]} : vector<16x32xf32> to vector<8x16xf32>
    %54 = vector.extract_strided_slice %32 {offsets = [0, 16], sizes = [8, 16], strides = [1, 1]} : vector<16x32xf32> to vector<8x16xf32>
    %55 = tpu.transpose %53, [1, 0] : vector<8x16xf32> -> vector<16x8xf32>
    %cst_18 = arith.constant dense<0.000000e+00> : vector<8x8xf32>
    %56 = tpu.matmul %52, %55, %cst_18 {dimension_numbers = #tpu.dot_dimension_numbers<[1], [0], [0], [1], [0, 0, 1, 1], [], []>} : vector<8x16xf32>, vector<16x8xf32>, vector<8x8xf32> -> vector<8x8xf32>
    %57 = vector.broadcast %33 : vector<1x8xf32> to vector<8x8xf32>
    %58 = arith.addf %56, %57 : vector<8x8xf32>
    %cst_19 = arith.constant dense<0xFF800000> : vector<8xf32>
    %59 = vector.multi_reduction <maximumf>, %58, %cst_19 [1] : vector<8x8xf32> to vector<8xf32>
    %60 = vector.shape_cast %59 : vector<8xf32> to vector<8x1xf32>
    %61 = vector.broadcast %60 : vector<8x1xf32> to vector<8x8xf32>
    %62 = arith.subf %58, %61 : vector<8x8xf32>
    %63 = math.exp %62 : vector<8x8xf32>
    %cst_20 = arith.constant dense<0.000000e+00> : vector<8xf32>
    %64 = vector.multi_reduction <add>, %63, %cst_20 [1] : vector<8x8xf32> to vector<8xf32>
    %65 = vector.shape_cast %64 : vector<8xf32> to vector<8x1xf32>
    %66 = tpu.reciprocal %65 {approx = true} : vector<8x1xf32> -> vector<8x1xf32>
    %67 = vector.broadcast %66 : vector<8x1xf32> to vector<8x8xf32>
    %68 = arith.mulf %63, %67 : vector<8x8xf32>
    %cst_21 = arith.constant dense<0.000000e+00> : vector<8x16xf32>
    %69 = tpu.matmul %68, %54, %cst_21 {dimension_numbers = #tpu.dot_dimension_numbers<[1], [0], [0], [1], [0, 0, 1, 1], [], []>} : vector<8x8xf32>, vector<8x16xf32>, vector<8x16xf32> -> vector<8x16xf32>
    %70 = tpu.concatenate %51, %69 in 1 : vector<8x16xf32>, vector<8x16xf32> -> vector<8x32xf32>
    %c1 = arith.constant 1 : index
    %c0_22 = arith.constant 0 : index
    %71 = vector.load %arg1[%c1, %c0_22] : memref<2x8xf32, #tpu.memory_space<vmem>>, vector<1x8xf32>
    %72 = vector.extract_strided_slice %30 {offsets = [8, 0], sizes = [8, 16], strides = [1, 1]} : vector<16x32xf32> to vector<8x16xf32>
    %73 = vector.extract_strided_slice %31 {offsets = [8, 0], sizes = [8, 16], strides = [1, 1]} : vector<16x32xf32> to vector<8x16xf32>
    %74 = vector.extract_strided_slice %32 {offsets = [8, 0], sizes = [8, 16], strides = [1, 1]} : vector<16x32xf32> to vector<8x16xf32>
    %75 = tpu.transpose %73, [1, 0] : vector<8x16xf32> -> vector<16x8xf32>
    %cst_23 = arith.constant dense<0.000000e+00> : vector<8x8xf32>
    %76 = tpu.matmul %72, %75, %cst_23 {dimension_numbers = #tpu.dot_dimension_numbers<[1], [0], [0], [1], [0, 0, 1, 1], [], []>} : vector<8x16xf32>, vector<16x8xf32>, vector<8x8xf32> -> vector<8x8xf32>
    %77 = vector.broadcast %71 : vector<1x8xf32> to vector<8x8xf32>
    %78 = arith.addf %76, %77 : vector<8x8xf32>
    %cst_24 = arith.constant dense<0xFF800000> : vector<8xf32>
    %79 = vector.multi_reduction <maximumf>, %78, %cst_24 [1] : vector<8x8xf32> to vector<8xf32>
    %80 = vector.shape_cast %79 : vector<8xf32> to vector<8x1xf32>
    %81 = vector.broadcast %80 : vector<8x1xf32> to vector<8x8xf32>
    %82 = arith.subf %78, %81 : vector<8x8xf32>
    %83 = math.exp %82 : vector<8x8xf32>
    %cst_25 = arith.constant dense<0.000000e+00> : vector<8xf32>
    %84 = vector.multi_reduction <add>, %83, %cst_25 [1] : vector<8x8xf32> to vector<8xf32>
    %85 = vector.shape_cast %84 : vector<8xf32> to vector<8x1xf32>
    %86 = tpu.reciprocal %85 {approx = true} : vector<8x1xf32> -> vector<8x1xf32>
    %87 = vector.broadcast %86 : vector<8x1xf32> to vector<8x8xf32>
    %88 = arith.mulf %83, %87 : vector<8x8xf32>
    %cst_26 = arith.constant dense<0.000000e+00> : vector<8x16xf32>
    %89 = tpu.matmul %88, %74, %cst_26 {dimension_numbers = #tpu.dot_dimension_numbers<[1], [0], [0], [1], [0, 0, 1, 1], [], []>} : vector<8x8xf32>, vector<8x16xf32>, vector<8x16xf32> -> vector<8x16xf32>
    %90 = vector.extract_strided_slice %30 {offsets = [8, 16], sizes = [8, 16], strides = [1, 1]} : vector<16x32xf32> to vector<8x16xf32>
    %91 = vector.extract_strided_slice %31 {offsets = [8, 16], sizes = [8, 16], strides = [1, 1]} : vector<16x32xf32> to vector<8x16xf32>
    %92 = vector.extract_strided_slice %32 {offsets = [8, 16], sizes = [8, 16], strides = [1, 1]} : vector<16x32xf32> to vector<8x16xf32>
    %93 = tpu.transpose %91, [1, 0] : vector<8x16xf32> -> vector<16x8xf32>
    %cst_27 = arith.constant dense<0.000000e+00> : vector<8x8xf32>
    %94 = tpu.matmul %90, %93, %cst_27 {dimension_numbers = #tpu.dot_dimension_numbers<[1], [0], [0], [1], [0, 0, 1, 1], [], []>} : vector<8x16xf32>, vector<16x8xf32>, vector<8x8xf32> -> vector<8x8xf32>
    %95 = vector.broadcast %71 : vector<1x8xf32> to vector<8x8xf32>
    %96 = arith.addf %94, %95 : vector<8x8xf32>
    %cst_28 = arith.constant dense<0xFF800000> : vector<8xf32>
    %97 = vector.multi_reduction <maximumf>, %96, %cst_28 [1] : vector<8x8xf32> to vector<8xf32>
    %98 = vector.shape_cast %97 : vector<8xf32> to vector<8x1xf32>
    %99 = vector.broadcast %98 : vector<8x1xf32> to vector<8x8xf32>
    %100 = arith.subf %96, %99 : vector<8x8xf32>
    %101 = math.exp %100 : vector<8x8xf32>
    %cst_29 = arith.constant dense<0.000000e+00> : vector<8xf32>
    %102 = vector.multi_reduction <add>, %101, %cst_29 [1] : vector<8x8xf32> to vector<8xf32>
    %103 = vector.shape_cast %102 : vector<8xf32> to vector<8x1xf32>
    %104 = tpu.reciprocal %103 {approx = true} : vector<8x1xf32> -> vector<8x1xf32>
    %105 = vector.broadcast %104 : vector<8x1xf32> to vector<8x8xf32>
    %106 = arith.mulf %101, %105 : vector<8x8xf32>
    %cst_30 = arith.constant dense<0.000000e+00> : vector<8x16xf32>
    %107 = tpu.matmul %106, %92, %cst_30 {dimension_numbers = #tpu.dot_dimension_numbers<[1], [0], [0], [1], [0, 0, 1, 1], [], []>} : vector<8x8xf32>, vector<8x16xf32>, vector<8x16xf32> -> vector<8x16xf32>
    %108 = tpu.concatenate %89, %107 in 1 : vector<8x16xf32>, vector<8x16xf32> -> vector<8x32xf32>
    %109 = tpu.concatenate %70, %108 in 0 : vector<8x32xf32>, vector<8x32xf32> -> vector<16x32xf32>
    %c0_31 = arith.constant 0 : index
    %c128_32 = arith.constant 128 : index
    %110 = vector.load %arg2[%c0_31, %c128_32] : memref<32x640xf32, #tpu.memory_space<vmem>>, vector<32x32xf32>
    %cst_33 = arith.constant dense<0.000000e+00> : vector<16x32xf32>
    %111 = tpu.matmul %109, %110, %cst_33 {dimension_numbers = #tpu.dot_dimension_numbers<[1], [0], [0], [1], [0, 0, 1, 1], [], []>} : vector<16x32xf32>, vector<32x32xf32>, vector<16x32xf32> -> vector<16x32xf32>
    %c0_34 = arith.constant 0 : index
    %c384 = arith.constant 384 : index
    %112 = vector.load %arg4[%c0_34, %c384] : memref<1x1536xf32, #tpu.memory_space<vmem>>, vector<1x32xf32>
    %113 = vector.broadcast %112 : vector<1x32xf32> to vector<16x32xf32>
    %114 = arith.addf %111, %113 : vector<16x32xf32>
    %115 = arith.addf %24, %114 : vector<16x32xf32>
    %c0_35 = arith.constant 0 : index
    %c512 = arith.constant 512 : index
    %116 = vector.load %arg4[%c0_35, %c512] : memref<1x1536xf32, #tpu.memory_space<vmem>>, vector<1x32xf32>
    %c0_36 = arith.constant 0 : index
    %c640 = arith.constant 640 : index
    %117 = vector.load %arg4[%c0_36, %c640] : memref<1x1536xf32, #tpu.memory_space<vmem>>, vector<1x32xf32>
    %cst_37 = arith.constant dense<0.000000e+00> : vector<16xf32>
    %118 = vector.multi_reduction <add>, %115, %cst_37 [1] : vector<16x32xf32> to vector<16xf32>
    %119 = vector.shape_cast %118 : vector<16xf32> to vector<16x1xf32>
    %cst_38 = arith.constant 3.200000e+01 : f32
    %120 = vector.broadcast %cst_38 : f32 to vector<16x1xf32>
    %121 = arith.divf %119, %120 : vector<16x1xf32>
    %122 = vector.broadcast %121 : vector<16x1xf32> to vector<16x32xf32>
    %123 = arith.subf %115, %122 : vector<16x32xf32>
    %124 = arith.mulf %123, %123 : vector<16x32xf32>
    %cst_39 = arith.constant dense<0.000000e+00> : vector<16xf32>
    %125 = vector.multi_reduction <add>, %124, %cst_39 [1] : vector<16x32xf32> to vector<16xf32>
    %126 = vector.shape_cast %125 : vector<16xf32> to vector<16x1xf32>
    %cst_40 = arith.constant 3.200000e+01 : f32
    %127 = vector.broadcast %cst_40 : f32 to vector<16x1xf32>
    %128 = arith.divf %126, %127 : vector<16x1xf32>
    %129 = vector.broadcast %121 : vector<16x1xf32> to vector<16x32xf32>
    %130 = arith.subf %115, %129 : vector<16x32xf32>
    %cst_41 = arith.constant 9.99999996E-13 : f32
    %131 = vector.broadcast %cst_41 : f32 to vector<16x1xf32>
    %132 = arith.addf %128, %131 : vector<16x1xf32>
    %133 = math.rsqrt %132 : vector<16x1xf32>
    %134 = vector.broadcast %133 : vector<16x1xf32> to vector<16x32xf32>
    %135 = arith.mulf %130, %134 : vector<16x32xf32>
    %136 = vector.broadcast %116 : vector<1x32xf32> to vector<16x32xf32>
    %137 = arith.mulf %135, %136 : vector<16x32xf32>
    %138 = vector.broadcast %117 : vector<1x32xf32> to vector<16x32xf32>
    %139 = arith.addf %137, %138 : vector<16x32xf32>
    %c0_42 = arith.constant 0 : index
    %c256_43 = arith.constant 256 : index
    %140 = vector.load %arg2[%c0_42, %c256_43] : memref<32x640xf32, #tpu.memory_space<vmem>>, vector<32x128xf32>
    %cst_44 = arith.constant dense<0.000000e+00> : vector<16x128xf32>
    %141 = tpu.matmul %139, %140, %cst_44 {dimension_numbers = #tpu.dot_dimension_numbers<[1], [0], [0], [1], [0, 0, 1, 1], [], []>} : vector<16x32xf32>, vector<32x128xf32>, vector<16x128xf32> -> vector<16x128xf32>
    %c0_45 = arith.constant 0 : index
    %c768 = arith.constant 768 : index
    %142 = vector.load %arg4[%c0_45, %c768] : memref<1x1536xf32, #tpu.memory_space<vmem>>, vector<1x128xf32>
    %143 = vector.broadcast %142 : vector<1x128xf32> to vector<16x128xf32>
    %144 = arith.addf %141, %143 : vector<16x128xf32>
    %cst_46 = arith.constant 5.000000e-01 : f32
    %145 = vector.broadcast %cst_46 : f32 to vector<16x128xf32>
    %146 = arith.mulf %145, %144 : vector<16x128xf32>
    %cst_47 = arith.constant 4.471500e-02 : f32
    %147 = vector.broadcast %cst_47 : f32 to vector<16x128xf32>
    %148 = arith.mulf %147, %144 : vector<16x128xf32>
    %149 = arith.mulf %148, %144 : vector<16x128xf32>
    %150 = arith.mulf %149, %144 : vector<16x128xf32>
    %151 = arith.addf %144, %150 : vector<16x128xf32>
    %cst_48 = arith.constant 0.797884583 : f32
    %152 = vector.broadcast %cst_48 : f32 to vector<16x128xf32>
    %153 = arith.mulf %152, %151 : vector<16x128xf32>
    %154 = math.tanh %153 : vector<16x128xf32>
    %cst_49 = arith.constant 1.000000e+00 : f32
    %155 = vector.broadcast %cst_49 : f32 to vector<16x128xf32>
    %156 = arith.addf %155, %154 : vector<16x128xf32>
    %157 = arith.mulf %146, %156 : vector<16x128xf32>
    %c0_50 = arith.constant 0 : index
    %c0_51 = arith.constant 0 : index
    %158 = vector.load %arg3[%c0_50, %c0_51] : memref<128x32xf32, #tpu.memory_space<vmem>>, vector<128x32xf32>
    %cst_52 = arith.constant dense<0.000000e+00> : vector<16x32xf32>
    %159 = tpu.matmul %157, %158, %cst_52 {dimension_numbers = #tpu.dot_dimension_numbers<[1], [0], [0], [1], [0, 0, 1, 1], [], []>} : vector<16x128xf32>, vector<128x32xf32>, vector<16x32xf32> -> vector<16x32xf32>
    %c0_53 = arith.constant 0 : index
    %c896 = arith.constant 896 : index
    %160 = vector.load %arg4[%c0_53, %c896] : memref<1x1536xf32, #tpu.memory_space<vmem>>, vector<1x32xf32>
    %161 = vector.broadcast %160 : vector<1x32xf32> to vector<16x32xf32>
    %162 = arith.addf %159, %161 : vector<16x32xf32>
    %163 = arith.addf %139, %162 : vector<16x32xf32>
    %c0_54 = arith.constant 0 : index
    %c1024 = arith.constant 1024 : index
    %164 = vector.load %arg4[%c0_54, %c1024] : memref<1x1536xf32, #tpu.memory_space<vmem>>, vector<1x32xf32>
    %c0_55 = arith.constant 0 : index
    %c1152 = arith.constant 1152 : index
    %165 = vector.load %arg4[%c0_55, %c1152] : memref<1x1536xf32, #tpu.memory_space<vmem>>, vector<1x32xf32>
    %cst_56 = arith.constant dense<0.000000e+00> : vector<16xf32>
    %166 = vector.multi_reduction <add>, %163, %cst_56 [1] : vector<16x32xf32> to vector<16xf32>
    %167 = vector.shape_cast %166 : vector<16xf32> to vector<16x1xf32>
    %cst_57 = arith.constant 3.200000e+01 : f32
    %168 = vector.broadcast %cst_57 : f32 to vector<16x1xf32>
    %169 = arith.divf %167, %168 : vector<16x1xf32>
    %170 = vector.broadcast %169 : vector<16x1xf32> to vector<16x32xf32>
    %171 = arith.subf %163, %170 : vector<16x32xf32>
    %172 = arith.mulf %171, %171 : vector<16x32xf32>
    %cst_58 = arith.constant dense<0.000000e+00> : vector<16xf32>
    %173 = vector.multi_reduction <add>, %172, %cst_58 [1] : vector<16x32xf32> to vector<16xf32>
    %174 = vector.shape_cast %173 : vector<16xf32> to vector<16x1xf32>
    %cst_59 = arith.constant 3.200000e+01 : f32
    %175 = vector.broadcast %cst_59 : f32 to vector<16x1xf32>
    %176 = arith.divf %174, %175 : vector<16x1xf32>
    %177 = vector.broadcast %169 : vector<16x1xf32> to vector<16x32xf32>
    %178 = arith.subf %163, %177 : vector<16x32xf32>
    %cst_60 = arith.constant 9.99999996E-13 : f32
    %179 = vector.broadcast %cst_60 : f32 to vector<16x1xf32>
    %180 = arith.addf %176, %179 : vector<16x1xf32>
    %181 = math.rsqrt %180 : vector<16x1xf32>
    %182 = vector.broadcast %181 : vector<16x1xf32> to vector<16x32xf32>
    %183 = arith.mulf %178, %182 : vector<16x32xf32>
    %184 = vector.broadcast %164 : vector<1x32xf32> to vector<16x32xf32>
    %185 = arith.mulf %183, %184 : vector<16x32xf32>
    %186 = vector.broadcast %165 : vector<1x32xf32> to vector<16x32xf32>
    %187 = arith.addf %185, %186 : vector<16x32xf32>
    %188 = vector.extract_strided_slice %187 {offsets = [0, 0], sizes = [1, 32], strides = [1, 1]} : vector<16x32xf32> to vector<1x32xf32>
    %189 = vector.extract_strided_slice %187 {offsets = [8, 0], sizes = [1, 32], strides = [1, 1]} : vector<16x32xf32> to vector<1x32xf32>
    %190 = tpu.concatenate %188, %189 in 0 : vector<1x32xf32>, vector<1x32xf32> -> vector<2x32xf32>
    %c0_61 = arith.constant 0 : index
    %c384_62 = arith.constant 384 : index
    %191 = vector.load %arg2[%c0_61, %c384_62] : memref<32x640xf32, #tpu.memory_space<vmem>>, vector<32x32xf32>
    %cst_63 = arith.constant dense<0.000000e+00> : vector<2x32xf32>
    %192 = tpu.matmul %190, %191, %cst_63 {dimension_numbers = #tpu.dot_dimension_numbers<[1], [0], [0], [1], [0, 0, 1, 1], [], []>} : vector<2x32xf32>, vector<32x32xf32>, vector<2x32xf32> -> vector<2x32xf32>
    %c0_64 = arith.constant 0 : index
    %c1280 = arith.constant 1280 : index
    %193 = vector.load %arg4[%c0_64, %c1280] : memref<1x1536xf32, #tpu.memory_space<vmem>>, vector<1x32xf32>
    %194 = vector.broadcast %193 : vector<1x32xf32> to vector<2x32xf32>
    %195 = arith.addf %192, %194 : vector<2x32xf32>
    %196 = math.tanh %195 : vector<2x32xf32>
    %c0_65 = arith.constant 0 : index
    %c512_66 = arith.constant 512 : index
    %197 = vector.load %arg2[%c0_65, %c512_66] : memref<32x640xf32, #tpu.memory_space<vmem>>, vector<32x128xf32>
    %cst_67 = arith.constant dense<0.000000e+00> : vector<2x128xf32>
    %198 = tpu.matmul %196, %197, %cst_67 {dimension_numbers = #tpu.dot_dimension_numbers<[1], [0], [0], [1], [0, 0, 1, 1], [], []>} : vector<2x32xf32>, vector<32x128xf32>, vector<2x128xf32> -> vector<2x128xf32>
    %c0_68 = arith.constant 0 : index
    %c1408 = arith.constant 1408 : index
    %199 = vector.load %arg4[%c0_68, %c1408] : memref<1x1536xf32, #tpu.memory_space<vmem>>, vector<1x128xf32>
    %200 = vector.broadcast %199 : vector<1x128xf32> to vector<2x128xf32>
    %201 = arith.addf %198, %200 : vector<2x128xf32>
    %c0_69 = arith.constant 0 : index
    %c0_70 = arith.constant 0 : index
    %202 = vector.load %arg5[%c0_69, %c0_70] : memref<2x128xf32, #tpu.memory_space<vmem>>, vector<2x128xf32>
    tpu.vector_store %arg5[%c0_69, %c0_70], %201 {strides = array<i32>} : memref<2x128xf32, #tpu.memory_space<vmem>>, vector<2x128xf32>,
    return
  }
}

</mosaic_0001>

<llo_original>
// kernel: bert_classifier_forward.1
$region0: #{bert_classifier_forward.1}
  #allocation0 [shape = 'u32[]', space=smem, size = 0x4, offset = 0x4, fixed_abs, tag = 'smem constant byte address 0x4 - core index']
  #allocation1 [shape = 'u32[144,128]{1,0:T(1,128)}', space=vmem, size = 0x12000, scoped, tag = 'internal scratch']
  %s0 = inlined_call_operand.vmem [shape: f32[16,32], index: 0, kind: input, shape index: {}]
  %s1 = inlined_call_operand.vmem [shape: f32[2,8], index: 1, kind: input, shape index: {}]
  %s2 = inlined_call_operand.vmem [shape: f32[32,640], index: 2, kind: input, shape index: {}]
  %s3 = inlined_call_operand.vmem [shape: f32[128,32], index: 3, kind: input, shape index: {}]
  %s4 = inlined_call_operand.vmem [shape: f32[1,1536], index: 4, kind: input, shape index: {}]
  %s5 = inlined_call_operand.hbm [shape: f32[2,128], index: 5, kind: output, shape index: {}]
  %s6 = sld [smem:[#allocation0]]
  $region30: #{bert_classifier_forward.1} parent=0
    _
  %s8 = ssub.s32 1, %s6
  %s9 = scalar_select 0, %s8, %s6
  $region1: #{bert_classifier_forward.1} parent=0
    #allocation2 [shape = 'u8[1024]{0}', space=vmem, size = 0x400, scoped, tag = 'output window, operand 0, single buffered']
    #allocation3 [shape = 's32[1]{0}', space=sflag, size = 0x4, scoped, tag = 'scoped memory for bert_classifier_forward.1']
    %10 = vsyncpa [#allocation3], 0
    // Predicated region
    $region2: #{bert_classifier_forward.1} parent=1 // pred_check
      _
    $region3: #{bert_classifier_forward.1} parent=1 // pred_check_branch
      %12 = sbr.rel (0) target = $region5
    $region4: #{bert_classifier_forward.1} parent=1 // pred_region
      _
    $region5: #{bert_classifier_forward.1} parent=1 // pred_fallthru
      _
    // Predicated region
    $region6: #{bert_classifier_forward.1} parent=1 // pred_check
      _
    $region7: #{bert_classifier_forward.1} parent=1 // pred_check_branch
      %14 = sbr.rel (0) target = $region9
    $region8: #{bert_classifier_forward.1} parent=1 // pred_region
      _
    $region9: #{bert_classifier_forward.1} parent=1 // pred_fallthru
      _
    // Predicated region
    $region10: #{bert_classifier_forward.1} parent=1 // pred_check
      _
    $region11: #{bert_classifier_forward.1} parent=1 // pred_check_branch
      %16 = sbr.rel (0) target = $region13
    $region12: #{bert_classifier_forward.1} parent=1 // pred_region
      _
    $region13: #{bert_classifier_forward.1} parent=1 // pred_fallthru
      _
    // Predicated region
    $region14: #{bert_classifier_forward.1} parent=1 // pred_check
      _
    $region15: #{bert_classifier_forward.1} parent=1 // pred_check_branch
      %18 = sbr.rel (0) target = $region17
    $region16: #{bert_classifier_forward.1} parent=1 // pred_region
      _
    $region17: #{bert_classifier_forward.1} parent=1 // pred_fallthru
      _
    // Predicated region
    $region18: #{bert_classifier_forward.1} parent=1 // pred_check
      _
    $region19: #{bert_classifier_forward.1} parent=1 // pred_check_branch
      %20 = sbr.rel (0) target = $region21
    $region20: #{bert_classifier_forward.1} parent=1 // pred_region
      _
    $region21: #{bert_classifier_forward.1} parent=1 // pred_fallthru
      _
    %v21 = vld [vmem:[%s0] sm:$0xff]
    %v22 = vld [vmem:[%s0 + $0x8] sm:$0xff]
    %v23 = vld [vmem:[%s4] sm:$0x1]
    %v24 = vld [vmem:[%s4 + $0x1] sm:$0x1]
    %vm25 = vcmask 261120
    %v26 = vsel %vm25, %v21, 0.0
    %27 = vadd.xlane.f32.xlu0 %v26
    %v28 = vpop.xlane.xlu0 %27
    %v29 = vsel %vm25, %v22, 0.0
    %30 = vadd.xlane.f32.xlu0 %v29
    %v31 = vpop.xlane.xlu0 %30
    %v32 = vrcp.pop 32.0
    %v33 = vmul.f32 %v28, %v32
    %v34 = vmul.f32 %v31, %v32
    %v35 = vsub.f32 %v21, %v33
    %v36 = vsub.f32 %v22, %v34
    %v37 = vmul.f32 %v35, %v35
    %v38 = vmul.f32 %v36, %v36
    %v39 = vsel %vm25, %v37, 0.0
    %40 = vadd.xlane.f32.xlu0 %v39
    %v41 = vpop.xlane.xlu0 %40
    %v42 = vsel %vm25, %v38, 0.0
    %43 = vadd.xlane.f32.xlu0 %v42
    %v44 = vpop.xlane.xlu0 %43
    %v45 = vmul.f32 %v41, %v32
    %v46 = vmul.f32 %v44, %v32
    %v47 = vadd.f32 %v45, 1e-12
    %v48 = vadd.f32 %v46, 1e-12
    %v49 = vrsqrt.pop %v47
    %v50 = vrsqrt.pop %v48
    %v51 = vmul.f32 %v35, %v49
    %v52 = vmul.f32 %v36, %v50
    %v54 = vlaneseq
    %v55 = vshrl.u32 %v54, 7
    %v56 = vsub.s32 0, %v55
    %v57 = vrot.slane %v23, %v56
    %v59 = vmul.f32 %v51, %v57
    %v60 = vmul.f32 %v52, %v57
    %v62 = vlaneseq
    %v63 = vshrl.u32 %v62, 7
    %v64 = vsub.s32 0, %v63
    %v65 = vrot.slane %v24, %v64
    %v67 = vadd.f32 %v59, %v65
    %v68 = vadd.f32 %v60, %v65
    %v69 = vld [vmem:[%s2] sm:$0xff]
    %v70 = vld [vmem:[%s2 + $0x28] sm:$0xff]
    %v71 = vld [vmem:[%s2 + $0x50] sm:$0xff]
    %v72 = vld [vmem:[%s2 + $0x78] sm:$0xff]
    %v73 = vld [vmem:[%s4 + $0x2] sm:$0x1]
    %v75 = vlaneseq
    %v76 = vshrl.u32 %v75, 7
    %v77 = vsub.s32 0, %v76
    %v78 = vrot.slane %v73, %v77
    %v81 = vsel %vm25, %v67, 0
    %v84 = vsel %vm25, %v68, 0
    %86 = vmatprep.subr.mxu0 0.0
    %87 = vmatpush1.msra.mxu0 %v69
    %88 = vmatprep.subr.mxu0 0.0
    %89 = vmatpush1.msra.mxu0 %v70
    %90 = vmatprep.subr.mxu0 0.0
    %91 = vmatpush1.msra.mxu0 %v71
    %92 = vmatprep.subr.mxu0 0.0
    %93 = vmatpush1.msra.mxu0 %v72
    %94 = vmatprep.subr.mxu0 0.0
    %95 = vmatpush1.msra.mxu0 0.0
    %96 = vmatprep.subr.mxu0 0.0
    %97 = vmatpush1.msra.mxu0 0.0
    %98 = vmatprep.subr.mxu0 0.0
    %99 = vmatpush1.msra.mxu0 0.0
    %100 = vmatprep.subr.mxu0 0.0
    %101 = vmatpush1.msra.mxu0 0.0
    %102 = vmatprep.subr.mxu0 0.0
    %103 = vmatpush1.msra.mxu0 0.0
    %104 = vmatprep.subr.mxu0 0.0
    %105 = vmatpush1.msra.mxu0 0.0
    %106 = vmatprep.subr.mxu0 0.0
    %107 = vmatpush1.msra.mxu0 0.0
    %108 = vmatprep.subr.mxu0 0.0
    %109 = vmatpush1.msra.mxu0 0.0
    %110 = vmatprep.subr.mxu0 0.0
    %111 = vmatpush1.msra.mxu0 0.0
    %112 = vmatprep.subr.mxu0 0.0
    %113 = vmatpush1.msra.mxu0 0.0
    %114 = vmatprep.subr.mxu0 0.0
    %115 = vmatpush1.msra.mxu0 0.0
    %116 = vmatprep.subr.mxu0 0.0
    %117 = vmatpush1.msra.mxu0 0.0
    %118 = vmatprep.subr.mxu0 0.0
    %119 = vmatpush1.msra.mxu0 0.0
    %120 = vmatprep.subr.mxu0 0.0
    %121 = vmatpush1.msra.mxu0 0.0
    %122 = vmatprep.subr.mxu0 0.0
    %123 = vmatpush1.msra.mxu0 0.0
    %124 = vmatprep.subr.mxu0 0.0
    %125 = vmatpush1.msra.mxu0 0.0
    %126 = vmatprep.subr.mxu0 0.0
    %127 = vmatpush1.msra.mxu0 0.0
    %128 = vmatprep.subr.mxu0 0.0
    %129 = vmatpush1.msra.mxu0 0.0
    %130 = vmatprep.subr.mxu0 0.0
    %131 = vmatpush1.msra.mxu0 0.0
    %132 = vmatprep.subr.mxu0 0.0
    %133 = vmatpush1.msra.mxu0 0.0
    %134 = vmatprep.subr.mxu0 0.0
    %135 = vmatpush1.msra.mxu0 0.0
    %136 = vmatprep.subr.mxu0 0.0
    %137 = vmatpush1.msra.mxu0 0.0
    %138 = vmatprep.subr.mxu0 0.0
    %139 = vmatpush1.msra.mxu0 0.0
    %140 = vmatprep.subr.mxu0 0.0
    %141 = vmatpush1.msra.mxu0 0.0
    %142 = vmatprep.subr.mxu0 0.0
    %143 = vmatpush1.msra.mxu0 0.0
    %144 = vmatprep.subr.mxu0 0.0
    %145 = vmatpush1.msra.mxu0 0.0
    %146 = vmatprep.subr.mxu0 0.0
    %147 = vmatpush1.msra.mxu0 0.0
    %148 = vmatprep.subr.mxu0 0.0
    %149 = vmatpush1.msra.mxu0 0.0
    %150 = vmatprep.mubr.f32.mxu0 0.0
    %151 = vmatmul.mubr.f32.gmra.mrb[0].mxu0 %v81
    %v152 = vpop.f32.mrb[0].mxu0
    %v153 = vadd.f32 %v78, %v152
    %v154 = vpop.f32.mrb[0].mxu0
    %155 = vmatprep.mubr.f32.mxu0 0.0
    %156 = vmatmul.mubr.f32.gmra.mrb[0].mxu0 %v84
    %v157 = vpop.f32.mrb[0].mxu0
    %v158 = vadd.f32 %v78, %v157
    %v159 = vpop.f32.mrb[0].mxu0
    %160 = vdwg.mxu0
    %v161 = vld [vmem:[%s1] sm:$0x1]
    %v162 = vlaneseq
    %v163 = vshrl.u32 %v162, 7
    %v164 = vsub.s32 0, %v163
    %v165 = vrot.slane %v161, %v164
    %167 = vrot.lane.b32.xlu0 %v153, 96
    %v168 = vpop.permute.xlu0 %167
    %vm169 = vcmask 130048
    %v170 = vsel %vm169, %v153, 0
    %v172 = vsel %vm169, %v168, 0
    %174 = vmatprep.subr.mxu0 0.0
    %175 = vmatpush1.xpose.msra.mxu0 %v172
    %176 = vmatprep.subr.mxu0 0.0
    %177 = vmatpush1.xpose.msra.mxu0 0.0
    %178 = vmatprep.subr.mxu0 0.0
    %179 = vmatpush1.xpose.msra.mxu0 0.0
    %180 = vmatprep.subr.mxu0 0.0
    %181 = vmatpush1.xpose.msra.mxu0 0.0
    %182 = vmatprep.subr.mxu0 0.0
    %183 = vmatpush1.xpose.msra.mxu0 0.0
    %184 = vmatprep.subr.mxu0 0.0
    %185 = vmatpush1.xpose.msra.mxu0 0.0
    %186 = vmatprep.subr.mxu0 0.0
    %187 = vmatpush1.xpose.msra.mxu0 0.0
    %188 = vmatprep.subr.mxu0 0.0
    %189 = vmatpush1.xpose.msra.mxu0 0.0
    %190 = vmatprep.subr.mxu0 0.0
    %191 = vmatpush1.xpose.msra.mxu0 0.0
    %192 = vmatprep.subr.mxu0 0.0
    %193 = vmatpush1.xpose.msra.mxu0 0.0
    %194 = vmatprep.subr.mxu0 0.0
    %195 = vmatpush1.xpose.msra.mxu0 0.0
    %196 = vmatprep.subr.mxu0 0.0
    %197 = vmatpush1.xpose.msra.mxu0 0.0
    %198 = vmatprep.subr.mxu0 0.0
    %199 = vmatpush1.xpose.msra.mxu0 0.0
    %200 = vmatprep.subr.mxu0 0.0
    %201 = vmatpush1.xpose.msra.mxu0 0.0
    %202 = vmatprep.subr.mxu0 0.0
    %203 = vmatpush1.xpose.msra.mxu0 0.0
    %204 = vmatprep.subr.mxu0 0.0
    %205 = vmatpush1.xpose.msra.mxu0 0.0
    %206 = vmatprep.subr.mxu0 0.0
    %207 = vmatpush1.xpose.msra.mxu0 0.0
    %208 = vmatprep.subr.mxu0 0.0
    %209 = vmatpush1.xpose.msra.mxu0 0.0
    %210 = vmatprep.subr.mxu0 0.0
    %211 = vmatpush1.xpose.msra.mxu0 0.0
    %212 = vmatprep.subr.mxu0 0.0
    %213 = vmatpush1.xpose.msra.mxu0 0.0
    %214 = vmatprep.subr.mxu0 0.0
    %215 = vmatpush1.xpose.msra.mxu0 0.0
    %216 = vmatprep.subr.mxu0 0.0
    %217 = vmatpush1.xpose.msra.mxu0 0.0
    %218 = vmatprep.subr.mxu0 0.0
    %219 = vmatpush1.xpose.msra.mxu0 0.0
    %220 = vmatprep.subr.mxu0 0.0
    %221 = vmatpush1.xpose.msra.mxu0 0.0
    %222 = vmatprep.subr.mxu0 0.0
    %223 = vmatpush1.xpose.msra.mxu0 0.0
    %224 = vmatprep.subr.mxu0 0.0
    %225 = vmatpush1.xpose.msra.mxu0 0.0
    %226 = vmatprep.subr.mxu0 0.0
    %227 = vmatpush1.xpose.msra.mxu0 0.0
    %228 = vmatprep.subr.mxu0 0.0
    %229 = vmatpush1.xpose.msra.mxu0 0.0
    %230 = vmatprep.subr.mxu0 0.0
    %231 = vmatpush1.xpose.msra.mxu0 0.0
    %232 = vmatprep.subr.mxu0 0.0
    %233 = vmatpush1.xpose.msra.mxu0 0.0
    %234 = vmatprep.subr.mxu0 0.0
    %235 = vmatpush1.xpose.msra.mxu0 0.0
    %236 = vmatprep.subr.mxu0 0.0
    %237 = vmatpush1.xpose.msra.mxu0 0.0
    %238 = vmatprep.mubr.f32.mxu0 0.0
    %239 = vmatmul.mubr.f32.gmra.mrb[0].mxu0 %v170
    %v240 = vpop.f32.mrb[0].mxu0
    %v241 = vadd.f32 %v165, %v240
    %v242 = vpop.f32.mrb[0].mxu0
    %243 = vdwg.mxu0
    %vm244 = vcmask 64512
    %v245 = vsel %vm244, %v241, -inf
    %246 = vmax.xlane.f32.xlu0 %v245
    %v247 = vpop.xlane.xlu0 %246
    %v248 = vsub.f32 %v241, %v247
    %v249 = vmul.f32 %v248, 1.442695
    %v250 = vpow.pop %v249
    %v251 = vsel %vm244, %v250, 0.0
    %252 = vadd.xlane.f32.xlu0 %v251
    %v253 = vpop.xlane.xlu0 %252
    %v254 = vrcp.pop %v253
    %v255 = vmul.f32 %v250, %v254
    %256 = vrot.lane.b32.xlu0 %v153, 64
    %v257 = vpop.permute.xlu0 %256
    %v260 = vsel %vm244, %v255, 0
    %262 = vmatprep.subr.mxu0 0.0
    %263 = vmatpush1.msra.mxu0 %v257
    %264 = vmatprep.subr.mxu0 0.0
    %265 = vmatpush1.msra.mxu0 0.0
    %266 = vmatprep.subr.mxu0 0.0
    %267 = vmatpush1.msra.mxu0 0.0
    %268 = vmatprep.subr.mxu0 0.0
    %269 = vmatpush1.msra.mxu0 0.0
    %270 = vmatprep.subr.mxu0 0.0
    %271 = vmatpush1.msra.mxu0 0.0
    %272 = vmatprep.subr.mxu0 0.0
    %273 = vmatpush1.msra.mxu0 0.0
    %274 = vmatprep.subr.mxu0 0.0
    %275 = vmatpush1.msra.mxu0 0.0
    %276 = vmatprep.subr.mxu0 0.0
    %277 = vmatpush1.msra.mxu0 0.0
    %278 = vmatprep.subr.mxu0 0.0
    %279 = vmatpush1.msra.mxu0 0.0
    %280 = vmatprep.subr.mxu0 0.0
    %281 = vmatpush1.msra.mxu0 0.0
    %282 = vmatprep.subr.mxu0 0.0
    %283 = vmatpush1.msra.mxu0 0.0
    %284 = vmatprep.subr.mxu0 0.0
    %285 = vmatpush1.msra.mxu0 0.0
    %286 = vmatprep.subr.mxu0 0.0
    %287 = vmatpush1.msra.mxu0 0.0
    %288 = vmatprep.subr.mxu0 0.0
    %289 = vmatpush1.msra.mxu0 0.0
    %290 = vmatprep.subr.mxu0 0.0
    %291 = vmatpush1.msra.mxu0 0.0
    %292 = vmatprep.subr.mxu0 0.0
    %293 = vmatpush1.msra.mxu0 0.0
    %294 = vmatprep.subr.mxu0 0.0
    %295 = vmatpush1.msra.mxu0 0.0
    %296 = vmatprep.subr.mxu0 0.0
    %297 = vmatpush1.msra.mxu0 0.0
    %298 = vmatprep.subr.mxu0 0.0
    %299 = vmatpush1.msra.mxu0 0.0
    %300 = vmatprep.subr.mxu0 0.0
    %301 = vmatpush1.msra.mxu0 0.0
    %302 = vmatprep.subr.mxu0 0.0
    %303 = vmatpush1.msra.mxu0 0.0
    %304 = vmatprep.subr.mxu0 0.0
    %305 = vmatpush1.msra.mxu0 0.0
    %306 = vmatprep.subr.mxu0 0.0
    %307 = vmatpush1.msra.mxu0 0.0
    %308 = vmatprep.subr.mxu0 0.0
    %309 = vmatpush1.msra.mxu0 0.0
    %310 = vmatprep.subr.mxu0 0.0
    %311 = vmatpush1.msra.mxu0 0.0
    %312 = vmatprep.subr.mxu0 0.0
    %313 = vmatpush1.msra.mxu0 0.0
    %314 = vmatprep.subr.mxu0 0.0
    %315 = vmatpush1.msra.mxu0 0.0
    %316 = vmatprep.subr.mxu0 0.0
    %317 = vmatpush1.msra.mxu0 0.0
    %318 = vmatprep.subr.mxu0 0.0
    %319 = vmatpush1.msra.mxu0 0.0
    %320 = vmatprep.subr.mxu0 0.0
    %321 = vmatpush1.msra.mxu0 0.0
    %322 = vmatprep.subr.mxu0 0.0
    %323 = vmatpush1.msra.mxu0 0.0
    %324 = vmatprep.subr.mxu0 0.0
    %325 = vmatpush1.msra.mxu0 0.0
    %326 = vmatprep.mubr.f32.mxu0 0.0
    %327 = vmatmul.mubr.f32.gmra.mrb[0].mxu0 %v260
    %v328 = vpop.f32.mrb[0].mxu0
    %v329 = vadd.f32 0.0, %v328
    %v330 = vpop.f32.mrb[0].mxu0
    %331 = vdwg.mxu0
    %332 = vrot.lane.b32.xlu0 %v153, 112
    %v333 = vpop.permute.xlu0 %332
    %334 = vrot.lane.b32.xlu0 %v153, 80
    %v335 = vpop.permute.xlu0 %334
    %v336 = vsel %vm169, %v333, 0
    %v338 = vsel %vm169, %v335, 0
    %340 = vmatprep.subr.mxu0 0.0
    %341 = vmatpush1.xpose.msra.mxu0 %v338
    %342 = vmatprep.subr.mxu0 0.0
    %343 = vmatpush1.xpose.msra.mxu0 0.0
    %344 = vmatprep.subr.mxu0 0.0
    %345 = vmatpush1.xpose.msra.mxu0 0.0
    %346 = vmatprep.subr.mxu0 0.0
    %347 = vmatpush1.xpose.msra.mxu0 0.0
    %348 = vmatprep.subr.mxu0 0.0
    %349 = vmatpush1.xpose.msra.mxu0 0.0
    %350 = vmatprep.subr.mxu0 0.0
    %351 = vmatpush1.xpose.msra.mxu0 0.0
    %352 = vmatprep.subr.mxu0 0.0
    %353 = vmatpush1.xpose.msra.mxu0 0.0
    %354 = vmatprep.subr.mxu0 0.0
    %355 = vmatpush1.xpose.msra.mxu0 0.0
    %356 = vmatprep.subr.mxu0 0.0
    %357 = vmatpush1.xpose.msra.mxu0 0.0
    %358 = vmatprep.subr.mxu0 0.0
    %359 = vmatpush1.xpose.msra.mxu0 0.0
    %360 = vmatprep.subr.mxu0 0.0
    %361 = vmatpush1.xpose.msra.mxu0 0.0
    %362 = vmatprep.subr.mxu0 0.0
    %363 = vmatpush1.xpose.msra.mxu0 0.0
    %364 = vmatprep.subr.mxu0 0.0
    %365 = vmatpush1.xpose.msra.mxu0 0.0
    %366 = vmatprep.subr.mxu0 0.0
    %367 = vmatpush1.xpose.msra.mxu0 0.0
    %368 = vmatprep.subr.mxu0 0.0
    %369 = vmatpush1.xpose.msra.mxu0 0.0
    %370 = vmatprep.subr.mxu0 0.0
    %371 = vmatpush1.xpose.msra.mxu0 0.0
    %372 = vmatprep.subr.mxu0 0.0
    %373 = vmatpush1.xpose.msra.mxu0 0.0
    %374 = vmatprep.subr.mxu0 0.0
    %375 = vmatpush1.xpose.msra.mxu0 0.0
    %376 = vmatprep.subr.mxu0 0.0
    %377 = vmatpush1.xpose.msra.mxu0 0.0
    %378 = vmatprep.subr.mxu0 0.0
    %379 = vmatpush1.xpose.msra.mxu0 0.0
    %380 = vmatprep.subr.mxu0 0.0
    %381 = vmatpush1.xpose.msra.mxu0 0.0
    %382 = vmatprep.subr.mxu0 0.0
    %383 = vmatpush1.xpose.msra.mxu0 0.0
    %384 = vmatprep.subr.mxu0 0.0
    %385 = vmatpush1.xpose.msra.mxu0 0.0
    %386 = vmatprep.subr.mxu0 0.0
    %387 = vmatpush1.xpose.msra.mxu0 0.0
    %388 = vmatprep.subr.mxu0 0.0
    %389 = vmatpush1.xpose.msra.mxu0 0.0
    %390 = vmatprep.subr.mxu0 0.0
    %391 = vmatpush1.xpose.msra.mxu0 0.0
    %392 = vmatprep.subr.mxu0 0.0
    %393 = vmatpush1.xpose.msra.mxu0 0.0
    %394 = vmatprep.subr.mxu0 0.0
    %395 = vmatpush1.xpose.msra.mxu0 0.0
    %396 = vmatprep.subr.mxu0 0.0
    %397 = vmatpush1.xpose.msra.mxu0 0.0
    %398 = vmatprep.subr.mxu0 0.0
    %399 = vmatpush1.xpose.msra.mxu0 0.0
    %400 = vmatprep.subr.mxu0 0.0
    %401 = vmatpush1.xpose.msra.mxu0 0.0
    %402 = vmatprep.subr.mxu0 0.0
    %403 = vmatpush1.xpose.msra.mxu0 0.0
    %404 = vmatprep.mubr.f32.mxu0 0.0
    %405 = vmatmul.mubr.f32.gmra.mrb[0].mxu0 %v336
    %v406 = vpop.f32.mrb[0].mxu0
    %v407 = vadd.f32 %v165, %v406
    %v408 = vpop.f32.mrb[0].mxu0
    %409 = vdwg.mxu0
    %v410 = vsel %vm244, %v407, -inf
    %411 = vmax.xlane.f32.xlu0 %v410
    %v412 = vpop.xlane.xlu0 %411
    %v413 = vsub.f32 %v407, %v412
    %v414 = vmul.f32 %v413, 1.442695
    %v415 = vpow.pop %v414
    %v416 = vsel %vm244, %v415, 0.0
    %417 = vadd.xlane.f32.xlu0 %v416
    %v418 = vpop.xlane.xlu0 %417
    %v419 = vrcp.pop %v418
    %v420 = vmul.f32 %v415, %v419
    %421 = vrot.lane.b32.xlu0 %v153, 48
    %v422 = vpop.permute.xlu0 %421
    %v425 = vsel %vm244, %v420, 0
    %427 = vmatprep.subr.mxu0 0.0
    %428 = vmatpush1.msra.mxu0 %v422
    %429 = vmatprep.subr.mxu0 0.0
    %430 = vmatpush1.msra.mxu0 0.0
    %431 = vmatprep.subr.mxu0 0.0
    %432 = vmatpush1.msra.mxu0 0.0
    %433 = vmatprep.subr.mxu0 0.0
    %434 = vmatpush1.msra.mxu0 0.0
    %435 = vmatprep.subr.mxu0 0.0
    %436 = vmatpush1.msra.mxu0 0.0
    %437 = vmatprep.subr.mxu0 0.0
    %438 = vmatpush1.msra.mxu0 0.0
    %439 = vmatprep.subr.mxu0 0.0
    %440 = vmatpush1.msra.mxu0 0.0
    %441 = vmatprep.subr.mxu0 0.0
    %442 = vmatpush1.msra.mxu0 0.0
    %443 = vmatprep.subr.mxu0 0.0
    %444 = vmatpush1.msra.mxu0 0.0
    %445 = vmatprep.subr.mxu0 0.0
    %446 = vmatpush1.msra.mxu0 0.0
    %447 = vmatprep.subr.mxu0 0.0
    %448 = vmatpush1.msra.mxu0 0.0
    %449 = vmatprep.subr.mxu0 0.0
    %450 = vmatpush1.msra.mxu0 0.0
    %451 = vmatprep.subr.mxu0 0.0
    %452 = vmatpush1.msra.mxu0 0.0
    %453 = vmatprep.subr.mxu0 0.0
    %454 = vmatpush1.msra.mxu0 0.0
    %455 = vmatprep.subr.mxu0 0.0
    %456 = vmatpush1.msra.mxu0 0.0
    %457 = vmatprep.subr.mxu0 0.0
    %458 = vmatpush1.msra.mxu0 0.0
    %459 = vmatprep.subr.mxu0 0.0
    %460 = vmatpush1.msra.mxu0 0.0
    %461 = vmatprep.subr.mxu0 0.0
    %462 = vmatpush1.msra.mxu0 0.0
    %463 = vmatprep.subr.mxu0 0.0
    %464 = vmatpush1.msra.mxu0 0.0
    %465 = vmatprep.subr.mxu0 0.0
    %466 = vmatpush1.msra.mxu0 0.0
    %467 = vmatprep.subr.mxu0 0.0
    %468 = vmatpush1.msra.mxu0 0.0
    %469 = vmatprep.subr.mxu0 0.0
    %470 = vmatpush1.msra.mxu0 0.0
    %471 = vmatprep.subr.mxu0 0.0
    %472 = vmatpush1.msra.mxu0 0.0
    %473 = vmatprep.subr.mxu0 0.0
    %474 = vmatpush1.msra.mxu0 0.0
    %475 = vmatprep.subr.mxu0 0.0
    %476 = vmatpush1.msra.mxu0 0.0
    %477 = vmatprep.subr.mxu0 0.0
    %478 = vmatpush1.msra.mxu0 0.0
    %479 = vmatprep.subr.mxu0 0.0
    %480 = vmatpush1.msra.mxu0 0.0
    %481 = vmatprep.subr.mxu0 0.0
    %482 = vmatpush1.msra.mxu0 0.0
    %483 = vmatprep.subr.mxu0 0.0
    %484 = vmatpush1.msra.mxu0 0.0
    %485 = vmatprep.subr.mxu0 0.0
    %486 = vmatpush1.msra.mxu0 0.0
    %487 = vmatprep.subr.mxu0 0.0
    %488 = vmatpush1.msra.mxu0 0.0
    %489 = vmatprep.subr.mxu0 0.0
    %490 = vmatpush1.msra.mxu0 0.0
    %491 = vmatprep.mubr.f32.mxu0 0.0
    %492 = vmatmul.mubr.f32.gmra.mrb[0].mxu0 %v425
    %v493 = vpop.f32.mrb[0].mxu0
    %v494 = vadd.f32 0.0, %v493
    %v495 = vpop.f32.mrb[0].mxu0
    %496 = vdwg.mxu0
    %498 = vrot.lane.b32.xlu0 %v494, 16
    %v499 = vpop.permute.xlu0 %498
    %v501 = vsel %vm169, %v329, %v499
    %v502 = vld [vmem:[%s1 + $0x1] sm:$0x1]
    %v503 = vlaneseq
    %v504 = vshrl.u32 %v503, 7
    %v505 = vsub.s32 0, %v504
    %v506 = vrot.slane %v502, %v505
    %508 = vrot.lane.b32.xlu0 %v158, 96
    %v509 = vpop.permute.xlu0 %508
    %v510 = vsel %vm169, %v158, 0
    %v512 = vsel %vm169, %v509, 0
    %514 = vmatprep.subr.mxu0 0.0
    %515 = vmatpush1.xpose.msra.mxu0 %v512
    %516 = vmatprep.subr.mxu0 0.0
    %517 = vmatpush1.xpose.msra.mxu0 0.0
    %518 = vmatprep.subr.mxu0 0.0
    %519 = vmatpush1.xpose.msra.mxu0 0.0
    %520 = vmatprep.subr.mxu0 0.0
    %521 = vmatpush1.xpose.msra.mxu0 0.0
    %522 = vmatprep.subr.mxu0 0.0
    %523 = vmatpush1.xpose.msra.mxu0 0.0
    %524 = vmatprep.subr.mxu0 0.0
    %525 = vmatpush1.xpose.msra.mxu0 0.0
    %526 = vmatprep.subr.mxu0 0.0
    %527 = vmatpush1.xpose.msra.mxu0 0.0
    %528 = vmatprep.subr.mxu0 0.0
    %529 = vmatpush1.xpose.msra.mxu0 0.0
    %530 = vmatprep.subr.mxu0 0.0
    %531 = vmatpush1.xpose.msra.mxu0 0.0
    %532 = vmatprep.subr.mxu0 0.0
    %533 = vmatpush1.xpose.msra.mxu0 0.0
    %534 = vmatprep.subr.mxu0 0.0
    %535 = vmatpush1.xpose.msra.mxu0 0.0
    %536 = vmatprep.subr.mxu0 0.0
    %537 = vmatpush1.xpose.msra.mxu0 0.0
    %538 = vmatprep.subr.mxu0 0.0
    %539 = vmatpush1.xpose.msra.mxu0 0.0
    %540 = vmatprep.subr.mxu0 0.0
    %541 = vmatpush1.xpose.msra.mxu0 0.0
    %542 = vmatprep.subr.mxu0 0.0
    %543 = vmatpush1.xpose.msra.mxu0 0.0
    %544 = vmatprep.subr.mxu0 0.0
    %545 = vmatpush1.xpose.msra.mxu0 0.0
    %546 = vmatprep.subr.mxu0 0.0
    %547 = vmatpush1.xpose.msra.mxu0 0.0
    %548 = vmatprep.subr.mxu0 0.0
    %549 = vmatpush1.xpose.msra.mxu0 0.0
    %550 = vmatprep.subr.mxu0 0.0
    %551 = vmatpush1.xpose.msra.mxu0 0.0
    %552 = vmatprep.subr.mxu0 0.0
    %553 = vmatpush1.xpose.msra.mxu0 0.0
    %554 = vmatprep.subr.mxu0 0.0
    %555 = vmatpush1.xpose.msra.mxu0 0.0
    %556 = vmatprep.subr.mxu0 0.0
    %557 = vmatpush1.xpose.msra.mxu0 0.0
    %558 = vmatprep.subr.mxu0 0.0
    %559 = vmatpush1.xpose.msra.mxu0 0.0
    %560 = vmatprep.subr.mxu0 0.0
    %561 = vmatpush1.xpose.msra.mxu0 0.0
    %562 = vmatprep.subr.mxu0 0.0
    %563 = vmatpush1.xpose.msra.mxu0 0.0
    %564 = vmatprep.subr.mxu0 0.0
    %565 = vmatpush1.xpose.msra.mxu0 0.0
    %566 = vmatprep.subr.mxu0 0.0
    %567 = vmatpush1.xpose.msra.mxu0 0.0
    %568 = vmatprep.subr.mxu0 0.0
    %569 = vmatpush1.xpose.msra.mxu0 0.0
    %570 = vmatprep.subr.mxu0 0.0
    %571 = vmatpush1.xpose.msra.mxu0 0.0
    %572 = vmatprep.subr.mxu0 0.0
    %573 = vmatpush1.xpose.msra.mxu0 0.0
    %574 = vmatprep.subr.mxu0 0.0
    %575 = vmatpush1.xpose.msra.mxu0 0.0
    %576 = vmatprep.subr.mxu0 0.0
    %577 = vmatpush1.xpose.msra.mxu0 0.0
    %578 = vmatprep.mubr.f32.mxu0 0.0
    %579 = vmatmul.mubr.f32.gmra.mrb[0].mxu0 %v510
    %v580 = vpop.f32.mrb[0].mxu0
    %v581 = vadd.f32 %v506, %v580
    %v582 = vpop.f32.mrb[0].mxu0
    %583 = vdwg.mxu0
    %v584 = vsel %vm244, %v581, -inf
    %585 = vmax.xlane.f32.xlu0 %v584
    %v586 = vpop.xlane.xlu0 %585
    %v587 = vsub.f32 %v581, %v586
    %v588 = vmul.f32 %v587, 1.442695
    %v589 = vpow.pop %v588
    %v590 = vsel %vm244, %v589, 0.0
    %591 = vadd.xlane.f32.xlu0 %v590
    %v592 = vpop.xlane.xlu0 %591
    %v593 = vrcp.pop %v592
    %v594 = vmul.f32 %v589, %v593
    %595 = vrot.lane.b32.xlu0 %v158, 64
    %v596 = vpop.permute.xlu0 %595
    %v599 = vsel %vm244, %v594, 0
    %601 = vmatprep.subr.mxu0 0.0
    %602 = vmatpush1.msra.mxu0 %v596
    %603 = vmatprep.subr.mxu0 0.0
    %604 = vmatpush1.msra.mxu0 0.0
    %605 = vmatprep.subr.mxu0 0.0
    %606 = vmatpush1.msra.mxu0 0.0
    %607 = vmatprep.subr.mxu0 0.0
    %608 = vmatpush1.msra.mxu0 0.0
    %609 = vmatprep.subr.mxu0 0.0
    %610 = vmatpush1.msra.mxu0 0.0
    %611 = vmatprep.subr.mxu0 0.0
    %612 = vmatpush1.msra.mxu0 0.0
    %613 = vmatprep.subr.mxu0 0.0
    %614 = vmatpush1.msra.mxu0 0.0
    %615 = vmatprep.subr.mxu0 0.0
    %616 = vmatpush1.msra.mxu0 0.0
    %617 = vmatprep.subr.mxu0 0.0
    %618 = vmatpush1.msra.mxu0 0.0
    %619 = vmatprep.subr.mxu0 0.0
    %620 = vmatpush1.msra.mxu0 0.0
    %621 = vmatprep.subr.mxu0 0.0
    %622 = vmatpush1.msra.mxu0 0.0
    %623 = vmatprep.subr.mxu0 0.0
    %624 = vmatpush1.msra.mxu0 0.0
    %625 = vmatprep.subr.mxu0 0.0
    %626 = vmatpush1.msra.mxu0 0.0
    %627 = vmatprep.subr.mxu0 0.0
    %628 = vmatpush1.msra.mxu0 0.0
    %629 = vmatprep.subr.mxu0 0.0
    %630 = vmatpush1.msra.mxu0 0.0
    %631 = vmatprep.subr.mxu0 0.0
    %632 = vmatpush1.msra.mxu0 0.0
    %633 = vmatprep.subr.mxu0 0.0
    %634 = vmatpush1.msra.mxu0 0.0
    %635 = vmatprep.subr.mxu0 0.0
    %636 = vmatpush1.msra.mxu0 0.0
    %637 = vmatprep.subr.mxu0 0.0
    %638 = vmatpush1.msra.mxu0 0.0
    %639 = vmatprep.subr.mxu0 0.0
    %640 = vmatpush1.msra.mxu0 0.0
    %641 = vmatprep.subr.mxu0 0.0
    %642 = vmatpush1.msra.mxu0 0.0
    %643 = vmatprep.subr.mxu0 0.0
    %644 = vmatpush1.msra.mxu0 0.0
    %645 = vmatprep.subr.mxu0 0.0
    %646 = vmatpush1.msra.mxu0 0.0
    %647 = vmatprep.subr.mxu0 0.0
    %648 = vmatpush1.msra.mxu0 0.0
    %649 = vmatprep.subr.mxu0 0.0
    %650 = vmatpush1.msra.mxu0 0.0
    %651 = vmatprep.subr.mxu0 0.0
    %652 = vmatpush1.msra.mxu0 0.0
    %653 = vmatprep.subr.mxu0 0.0
    %654 = vmatpush1.msra.mxu0 0.0
    %655 = vmatprep.subr.mxu0 0.0
    %656 = vmatpush1.msra.mxu0 0.0
    %657 = vmatprep.subr.mxu0 0.0
    %658 = vmatpush1.msra.mxu0 0.0
    %659 = vmatprep.subr.mxu0 0.0
    %660 = vmatpush1.msra.mxu0 0.0
    %661 = vmatprep.subr.mxu0 0.0
    %662 = vmatpush1.msra.mxu0 0.0
    %663 = vmatprep.subr.mxu0 0.0
    %664 = vmatpush1.msra.mxu0 0.0
    %665 = vmatprep.mubr.f32.mxu0 0.0
    %666 = vmatmul.mubr.f32.gmra.mrb[0].mxu0 %v599
    %v667 = vpop.f32.mrb[0].mxu0
    %v668 = vadd.f32 0.0, %v667
    %v669 = vpop.f32.mrb[0].mxu0
    %670 = vdwg.mxu0
    %671 = vrot.lane.b32.xlu0 %v158, 112
    %v672 = vpop.permute.xlu0 %671
    %673 = vrot.lane.b32.xlu0 %v158, 80
    %v674 = vpop.permute.xlu0 %673
    %v675 = vsel %vm169, %v672, 0
    %v677 = vsel %vm169, %v674, 0
    %679 = vmatprep.subr.mxu0 0.0
    %680 = vmatpush1.xpose.msra.mxu0 %v677
    %681 = vmatprep.subr.mxu0 0.0
    %682 = vmatpush1.xpose.msra.mxu0 0.0
    %683 = vmatprep.subr.mxu0 0.0
    %684 = vmatpush1.xpose.msra.mxu0 0.0
    %685 = vmatprep.subr.mxu0 0.0
    %686 = vmatpush1.xpose.msra.mxu0 0.0
    %687 = vmatprep.subr.mxu0 0.0
    %688 = vmatpush1.xpose.msra.mxu0 0.0
    %689 = vmatprep.subr.mxu0 0.0
    %690 = vmatpush1.xpose.msra.mxu0 0.0
    %691 = vmatprep.subr.mxu0 0.0
    %692 = vmatpush1.xpose.msra.mxu0 0.0
    %693 = vmatprep.subr.mxu0 0.0
    %694 = vmatpush1.xpose.msra.mxu0 0.0
    %695 = vmatprep.subr.mxu0 0.0
    %696 = vmatpush1.xpose.msra.mxu0 0.0
    %697 = vmatprep.subr.mxu0 0.0
    %698 = vmatpush1.xpose.msra.mxu0 0.0
    %699 = vmatprep.subr.mxu0 0.0
    %700 = vmatpush1.xpose.msra.mxu0 0.0
    %701 = vmatprep.subr.mxu0 0.0
    %702 = vmatpush1.xpose.msra.mxu0 0.0
    %703 = vmatprep.subr.mxu0 0.0
    %704 = vmatpush1.xpose.msra.mxu0 0.0
    %705 = vmatprep.subr.mxu0 0.0
    %706 = vmatpush1.xpose.msra.mxu0 0.0
    %707 = vmatprep.subr.mxu0 0.0
    %708 = vmatpush1.xpose.msra.mxu0 0.0
    %709 = vmatprep.subr.mxu0 0.0
    %710 = vmatpush1.xpose.msra.mxu0 0.0
    %711 = vmatprep.subr.mxu0 0.0
    %712 = vmatpush1.xpose.msra.mxu0 0.0
    %713 = vmatprep.subr.mxu0 0.0
    %714 = vmatpush1.xpose.msra.mxu0 0.0
    %715 = vmatprep.subr.mxu0 0.0
    %716 = vmatpush1.xpose.msra.mxu0 0.0
    %717 = vmatprep.subr.mxu0 0.0
    %718 = vmatpush1.xpose.msra.mxu0 0.0
    %719 = vmatprep.subr.mxu0 0.0
    %720 = vmatpush1.xpose.msra.mxu0 0.0
    %721 = vmatprep.subr.mxu0 0.0
    %722 = vmatpush1.xpose.msra.mxu0 0.0
    %723 = vmatprep.subr.mxu0 0.0
    %724 = vmatpush1.xpose.msra.mxu0 0.0
    %725 = vmatprep.subr.mxu0 0.0
    %726 = vmatpush1.xpose.msra.mxu0 0.0
    %727 = vmatprep.subr.mxu0 0.0
    %728 = vmatpush1.xpose.msra.mxu0 0.0
    %729 = vmatprep.subr.mxu0 0.0
    %730 = vmatpush1.xpose.msra.mxu0 0.0
    %731 = vmatprep.subr.mxu0 0.0
    %732 = vmatpush1.xpose.msra.mxu0 0.0
    %733 = vmatprep.subr.mxu0 0.0
    %734 = vmatpush1.xpose.msra.mxu0 0.0
    %735 = vmatprep.subr.mxu0 0.0
    %736 = vmatpush1.xpose.msra.mxu0 0.0
    %737 = vmatprep.subr.mxu0 0.0
    %738 = vmatpush1.xpose.msra.mxu0 0.0
    %739 = vmatprep.subr.mxu0 0.0
    %740 = vmatpush1.xpose.msra.mxu0 0.0
    %741 = vmatprep.subr.mxu0 0.0
    %742 = vmatpush1.xpose.msra.mxu0 0.0
    %743 = vmatprep.mubr.f32.mxu0 0.0
    %744 = vmatmul.mubr.f32.gmra.mrb[0].mxu0 %v675
    %v745 = vpop.f32.mrb[0].mxu0
    %v746 = vadd.f32 %v506, %v745
    %v747 = vpop.f32.mrb[0].mxu0
    %748 = vdwg.mxu0
    %v749 = vsel %vm244, %v746, -inf
    %750 = vmax.xlane.f32.xlu0 %v749
    %v751 = vpop.xlane.xlu0 %750
    %v752 = vsub.f32 %v746, %v751
    %v753 = vmul.f32 %v752, 1.442695
    %v754 = vpow.pop %v753
    %v755 = vsel %vm244, %v754, 0.0
    %756 = vadd.xlane.f32.xlu0 %v755
    %v757 = vpop.xlane.xlu0 %756
    %v758 = vrcp.pop %v757
    %v759 = vmul.f32 %v754, %v758
    %760 = vrot.lane.b32.xlu0 %v158, 48
    %v761 = vpop.permute.xlu0 %760
    %v764 = vsel %vm244, %v759, 0
    %766 = vmatprep.subr.mxu0 0.0
    %767 = vmatpush1.msra.mxu0 %v761
    %768 = vmatprep.subr.mxu0 0.0
    %769 = vmatpush1.msra.mxu0 0.0
    %770 = vmatprep.subr.mxu0 0.0
    %771 = vmatpush1.msra.mxu0 0.0
    %772 = vmatprep.subr.mxu0 0.0
    %773 = vmatpush1.msra.mxu0 0.0
    %774 = vmatprep.subr.mxu0 0.0
    %775 = vmatpush1.msra.mxu0 0.0
    %776 = vmatprep.subr.mxu0 0.0
    %777 = vmatpush1.msra.mxu0 0.0
    %778 = vmatprep.subr.mxu0 0.0
    %779 = vmatpush1.msra.mxu0 0.0
    %780 = vmatprep.subr.mxu0 0.0
    %781 = vmatpush1.msra.mxu0 0.0
    %782 = vmatprep.subr.mxu0 0.0
    %783 = vmatpush1.msra.mxu0 0.0
    %784 = vmatprep.subr.mxu0 0.0
    %785 = vmatpush1.msra.mxu0 0.0
    %786 = vmatprep.subr.mxu0 0.0
    %787 = vmatpush1.msra.mxu0 0.0
    %788 = vmatprep.subr.mxu0 0.0
    %789 = vmatpush1.msra.mxu0 0.0
    %790 = vmatprep.subr.mxu0 0.0
    %791 = vmatpush1.msra.mxu0 0.0
    %792 = vmatprep.subr.mxu0 0.0
    %793 = vmatpush1.msra.mxu0 0.0
    %794 = vmatprep.subr.mxu0 0.0
    %795 = vmatpush1.msra.mxu0 0.0
    %796 = vmatprep.subr.mxu0 0.0
    %797 = vmatpush1.msra.mxu0 0.0
    %798 = vmatprep.subr.mxu0 0.0
    %799 = vmatpush1.msra.mxu0 0.0
    %800 = vmatprep.subr.mxu0 0.0
    %801 = vmatpush1.msra.mxu0 0.0
    %802 = vmatprep.subr.mxu0 0.0
    %803 = vmatpush1.msra.mxu0 0.0
    %804 = vmatprep.subr.mxu0 0.0
    %805 = vmatpush1.msra.mxu0 0.0
    %806 = vmatprep.subr.mxu0 0.0
    %807 = vmatpush1.msra.mxu0 0.0
    %808 = vmatprep.subr.mxu0 0.0
    %809 = vmatpush1.msra.mxu0 0.0
    %810 = vmatprep.subr.mxu0 0.0
    %811 = vmatpush1.msra.mxu0 0.0
    %812 = vmatprep.subr.mxu0 0.0
    %813 = vmatpush1.msra.mxu0 0.0
    %814 = vmatprep.subr.mxu0 0.0
    %815 = vmatpush1.msra.mxu0 0.0
    %816 = vmatprep.subr.mxu0 0.0
    %817 = vmatpush1.msra.mxu0 0.0
    %818 = vmatprep.subr.mxu0 0.0
    %819 = vmatpush1.msra.mxu0 0.0
    %820 = vmatprep.subr.mxu0 0.0
    %821 = vmatpush1.msra.mxu0 0.0
    %822 = vmatprep.subr.mxu0 0.0
    %823 = vmatpush1.msra.mxu0 0.0
    %824 = vmatprep.subr.mxu0 0.0
    %825 = vmatpush1.msra.mxu0 0.0
    %826 = vmatprep.subr.mxu0 0.0
    %827 = vmatpush1.msra.mxu0 0.0
    %828 = vmatprep.subr.mxu0 0.0
    %829 = vmatpush1.msra.mxu0 0.0
    %830 = vmatprep.mubr.f32.mxu0 0.0
    %831 = vmatmul.mubr.f32.gmra.mrb[0].mxu0 %v764
    %v832 = vpop.f32.mrb[0].mxu0
    %v833 = vadd.f32 0.0, %v832
    %v834 = vpop.f32.mrb[0].mxu0
    %835 = vdwg.mxu0
    %837 = vrot.lane.b32.xlu0 %v833, 16
    %v838 = vpop.permute.xlu0 %837
    %v840 = vsel %vm169, %v668, %v838
    %v841 = vld [vmem:[%s2 + $0x8] sm:$0xff]
    %v842 = vld [vmem:[%s2 + $0x30] sm:$0xff]
    %v843 = vld [vmem:[%s2 + $0x58] sm:$0xff]
    %v844 = vld [vmem:[%s2 + $0x80] sm:$0xff]
    %v845 = vld [vmem:[%s4 + $0x3] sm:$0x1]
    %v847 = vlaneseq
    %v848 = vshrl.u32 %v847, 7
    %v849 = vsub.s32 0, %v848
    %v850 = vrot.slane %v845, %v849
    %v853 = vsel %vm25, %v501, 0
    %v856 = vsel %vm25, %v840, 0
    %858 = vmatprep.subr.mxu0 0.0
    %859 = vmatpush1.msra.mxu0 %v841
    %860 = vmatprep.subr.mxu0 0.0
    %861 = vmatpush1.msra.mxu0 %v842
    %862 = vmatprep.subr.mxu0 0.0
    %863 = vmatpush1.msra.mxu0 %v843
    %864 = vmatprep.subr.mxu0 0.0
    %865 = vmatpush1.msra.mxu0 %v844
    %866 = vmatprep.subr.mxu0 0.0
    %867 = vmatpush1.msra.mxu0 0.0
    %868 = vmatprep.subr.mxu0 0.0
    %869 = vmatpush1.msra.mxu0 0.0
    %870 = vmatprep.subr.mxu0 0.0
    %871 = vmatpush1.msra.mxu0 0.0
    %872 = vmatprep.subr.mxu0 0.0
    %873 = vmatpush1.msra.mxu0 0.0
    %874 = vmatprep.subr.mxu0 0.0
    %875 = vmatpush1.msra.mxu0 0.0
    %876 = vmatprep.subr.mxu0 0.0
    %877 = vmatpush1.msra.mxu0 0.0
    %878 = vmatprep.subr.mxu0 0.0
    %879 = vmatpush1.msra.mxu0 0.0
    %880 = vmatprep.subr.mxu0 0.0
    %881 = vmatpush1.msra.mxu0 0.0
    %882 = vmatprep.subr.mxu0 0.0
    %883 = vmatpush1.msra.mxu0 0.0
    %884 = vmatprep.subr.mxu0 0.0
    %885 = vmatpush1.msra.mxu0 0.0
    %886 = vmatprep.subr.mxu0 0.0
    %887 = vmatpush1.msra.mxu0 0.0
    %888 = vmatprep.subr.mxu0 0.0
    %889 = vmatpush1.msra.mxu0 0.0
    %890 = vmatprep.subr.mxu0 0.0
    %891 = vmatpush1.msra.mxu0 0.0
    %892 = vmatprep.subr.mxu0 0.0
    %893 = vmatpush1.msra.mxu0 0.0
    %894 = vmatprep.subr.mxu0 0.0
    %895 = vmatpush1.msra.mxu0 0.0
    %896 = vmatprep.subr.mxu0 0.0
    %897 = vmatpush1.msra.mxu0 0.0
    %898 = vmatprep.subr.mxu0 0.0
    %899 = vmatpush1.msra.mxu0 0.0
    %900 = vmatprep.subr.mxu0 0.0
    %901 = vmatpush1.msra.mxu0 0.0
    %902 = vmatprep.subr.mxu0 0.0
    %903 = vmatpush1.msra.mxu0 0.0
    %904 = vmatprep.subr.mxu0 0.0
    %905 = vmatpush1.msra.mxu0 0.0
    %906 = vmatprep.subr.mxu0 0.0
    %907 = vmatpush1.msra.mxu0 0.0
    %908 = vmatprep.subr.mxu0 0.0
    %909 = vmatpush1.msra.mxu0 0.0
    %910 = vmatprep.subr.mxu0 0.0
    %911 = vmatpush1.msra.mxu0 0.0
    %912 = vmatprep.subr.mxu0 0.0
    %913 = vmatpush1.msra.mxu0 0.0
    %914 = vmatprep.subr.mxu0 0.0
    %915 = vmatpush1.msra.mxu0 0.0
    %916 = vmatprep.subr.mxu0 0.0
    %917 = vmatpush1.msra.mxu0 0.0
    %918 = vmatprep.subr.mxu0 0.0
    %919 = vmatpush1.msra.mxu0 0.0
    %920 = vmatprep.subr.mxu0 0.0
    %921 = vmatpush1.msra.mxu0 0.0
    %922 = vmatprep.mubr.f32.mxu0 0.0
    %923 = vmatmul.mubr.f32.gmra.mrb[0].mxu0 %v853
    %v924 = vpop.f32.mrb[0].mxu0
    %v925 = vadd.f32 %v850, %v924
    %v926 = vpop.f32.mrb[0].mxu0
    %927 = vmatprep.mubr.f32.mxu0 0.0
    %928 = vmatmul.mubr.f32.gmra.mrb[0].mxu0 %v856
    %v929 = vpop.f32.mrb[0].mxu0
    %v930 = vadd.f32 %v850, %v929
    %v931 = vpop.f32.mrb[0].mxu0
    %932 = vdwg.mxu0
    %v933 = vadd.f32 %v67, %v925
    %v934 = vadd.f32 %v68, %v930
    %v935 = vld [vmem:[%s4 + $0x4] sm:$0x1]
    %v936 = vld [vmem:[%s4 + $0x5] sm:$0x1]
    %v937 = vsel %vm25, %v933, 0.0
    %938 = vadd.xlane.f32.xlu0 %v937
    %v939 = vpop.xlane.xlu0 %938
    %v940 = vsel %vm25, %v934, 0.0
    %941 = vadd.xlane.f32.xlu0 %v940
    %v942 = vpop.xlane.xlu0 %941
    %v943 = vmul.f32 %v939, %v32
    %v944 = vmul.f32 %v942, %v32
    %v945 = vsub.f32 %v933, %v943
    %v946 = vsub.f32 %v934, %v944
    %v947 = vmul.f32 %v945, %v945
    %v948 = vmul.f32 %v946, %v946
    %v949 = vsel %vm25, %v947, 0.0
    %950 = vadd.xlane.f32.xlu0 %v949
    %v951 = vpop.xlane.xlu0 %950
    %v952 = vsel %vm25, %v948, 0.0
    %953 = vadd.xlane.f32.xlu0 %v952
    %v954 = vpop.xlane.xlu0 %953
    %v955 = vmul.f32 %v951, %v32
    %v956 = vmul.f32 %v954, %v32
    %v957 = vadd.f32 %v955, 1e-12
    %v958 = vadd.f32 %v956, 1e-12
    %v959 = vrsqrt.pop %v957
    %v960 = vrsqrt.pop %v958
    %v961 = vmul.f32 %v945, %v959
    %v962 = vmul.f32 %v946, %v960
    %v964 = vlaneseq
    %v965 = vshrl.u32 %v964, 7
    %v966 = vsub.s32 0, %v965
    %v967 = vrot.slane %v935, %v966
    %v969 = vmul.f32 %v961, %v967
    %v970 = vmul.f32 %v962, %v967
    %v972 = vlaneseq
    %v973 = vshrl.u32 %v972, 7
    %v974 = vsub.s32 0, %v973
    %v975 = vrot.slane %v936, %v974
    %v977 = vadd.f32 %v969, %v975
    %v978 = vadd.f32 %v970, %v975
    %v979 = vld [vmem:[%s2 + $0x10] sm:$0xff]
    %v980 = vld [vmem:[%s2 + $0x38] sm:$0xff]
    %v981 = vld [vmem:[%s2 + $0x60] sm:$0xff]
    %v982 = vld [vmem:[%s2 + $0x88] sm:$0xff]
    %v983 = vld [vmem:[%s4 + $0x6] sm:$0x1]
    %v985 = vlaneseq
    %v986 = vshrl.u32 %v985, 7
    %v987 = vsub.s32 0, %v986
    %v988 = vrot.slane %v983, %v987
    %v991 = vsel %vm25, %v977, 0
    %v994 = vsel %vm25, %v978, 0
    %996 = vmatprep.subr.mxu0 0.0
    %997 = vmatpush1.msra.mxu0 %v979
    %998 = vmatprep.subr.mxu0 0.0
    %999 = vmatpush1.msra.mxu0 %v980
    %1000 = vmatprep.subr.mxu0 0.0
    %1001 = vmatpush1.msra.mxu0 %v981
    %1002 = vmatprep.subr.mxu0 0.0
    %1003 = vmatpush1.msra.mxu0 %v982
    %1004 = vmatprep.subr.mxu0 0.0
    %1005 = vmatpush1.msra.mxu0 0.0
    %1006 = vmatprep.subr.mxu0 0.0
    %1007 = vmatpush1.msra.mxu0 0.0
    %1008 = vmatprep.subr.mxu0 0.0
    %1009 = vmatpush1.msra.mxu0 0.0
    %1010 = vmatprep.subr.mxu0 0.0
    %1011 = vmatpush1.msra.mxu0 0.0
    %1012 = vmatprep.subr.mxu0 0.0
    %1013 = vmatpush1.msra.mxu0 0.0
    %1014 = vmatprep.subr.mxu0 0.0
    %1015 = vmatpush1.msra.mxu0 0.0
    %1016 = vmatprep.subr.mxu0 0.0
    %1017 = vmatpush1.msra.mxu0 0.0
    %1018 = vmatprep.subr.mxu0 0.0
    %1019 = vmatpush1.msra.mxu0 0.0
    %1020 = vmatprep.subr.mxu0 0.0
    %1021 = vmatpush1.msra.mxu0 0.0
    %1022 = vmatprep.subr.mxu0 0.0
    %1023 = vmatpush1.msra.mxu0 0.0
    %1024 = vmatprep.subr.mxu0 0.0
    %1025 = vmatpush1.msra.mxu0 0.0
    %1026 = vmatprep.subr.mxu0 0.0
    %1027 = vmatpush1.msra.mxu0 0.0
    %1028 = vmatprep.subr.mxu0 0.0
    %1029 = vmatpush1.msra.mxu0 0.0
    %1030 = vmatprep.subr.mxu0 0.0
    %1031 = vmatpush1.msra.mxu0 0.0
    %1032 = vmatprep.subr.mxu0 0.0
    %1033 = vmatpush1.msra.mxu0 0.0
    %1034 = vmatprep.subr.mxu0 0.0
    %1035 = vmatpush1.msra.mxu0 0.0
    %1036 = vmatprep.subr.mxu0 0.0
    %1037 = vmatpush1.msra.mxu0 0.0
    %1038 = vmatprep.subr.mxu0 0.0
    %1039 = vmatpush1.msra.mxu0 0.0
    %1040 = vmatprep.subr.mxu0 0.0
    %1041 = vmatpush1.msra.mxu0 0.0
    %1042 = vmatprep.subr.mxu0 0.0
    %1043 = vmatpush1.msra.mxu0 0.0
    %1044 = vmatprep.subr.mxu0 0.0
    %1045 = vmatpush1.msra.mxu0 0.0
    %1046 = vmatprep.subr.mxu0 0.0
    %1047 = vmatpush1.msra.mxu0 0.0
    %1048 = vmatprep.subr.mxu0 0.0
    %1049 = vmatpush1.msra.mxu0 0.0
    %1050 = vmatprep.subr.mxu0 0.0
    %1051 = vmatpush1.msra.mxu0 0.0
    %1052 = vmatprep.subr.mxu0 0.0
    %1053 = vmatpush1.msra.mxu0 0.0
    %1054 = vmatprep.subr.mxu0 0.0
    %1055 = vmatpush1.msra.mxu0 0.0
    %1056 = vmatprep.subr.mxu0 0.0
    %1057 = vmatpush1.msra.mxu0 0.0
    %1058 = vmatprep.subr.mxu0 0.0
    %1059 = vmatpush1.msra.mxu0 0.0
    %1060 = vmatprep.mubr.f32.mxu0 0.0
    %1061 = vmatmul.mubr.f32.gmra.mrb[0].mxu0 %v991
    %v1062 = vpop.f32.mrb[0].mxu0
    %v1063 = vadd.f32 %v988, %v1062
    %v1064 = vpop.f32.mrb[0].mxu0
    %1065 = vmatprep.mubr.f32.mxu0 0.0
    %1066 = vmatmul.mubr.f32.gmra.mrb[0].mxu0 %v994
    %v1067 = vpop.f32.mrb[0].mxu0
    %v1068 = vadd.f32 %v988, %v1067
    %v1069 = vpop.f32.mrb[0].mxu0
    %1070 = vdwg.mxu0
    %v1071 = vmul.f32 %v1063, 0.5
    %v1072 = vmul.f32 %v1068, 0.5
    %v1073 = vmul.f32 %v1063, 0.044715
    %v1074 = vmul.f32 %v1068, 0.044715
    %v1075 = vmul.f32 %v1073, %v1063
    %v1076 = vmul.f32 %v1074, %v1068
    %v1077 = vmul.f32 %v1075, %v1063
    %v1078 = vmul.f32 %v1076, %v1068
    %v1079 = vadd.f32 %v1063, %v1077
    %v1080 = vadd.f32 %v1068, %v1078
    %v1081 = vmul.f32 %v1079, 0.7978846
    %v1082 = vmul.f32 %v1080, 0.7978846
    %v1083 = vtanh.pop %v1081
    %v1084 = vtanh.pop %v1082
    %v1085 = vadd.f32 %v1083, 1.0
    %v1086 = vadd.f32 %v1084, 1.0
    %v1087 = vmul.f32 %v1071, %v1085
    %v1088 = vmul.f32 %v1072, %v1086
    %v1089 = vld [vmem:[%s3] sm:$0xff]
    %v1090 = vld [vmem:[%s3 + $0x8] sm:$0xff]
    %v1091 = vld [vmem:[%s3 + $0x10] sm:$0xff]
    %v1092 = vld [vmem:[%s3 + $0x18] sm:$0xff]
    %v1093 = vld [vmem:[%s3 + $0x20] sm:$0xff]
    %v1094 = vld [vmem:[%s3 + $0x28] sm:$0xff]
    %v1095 = vld [vmem:[%s3 + $0x30] sm:$0xff]
    %v1096 = vld [vmem:[%s3 + $0x38] sm:$0xff]
    %v1097 = vld [vmem:[%s3 + $0x40] sm:$0xff]
    %v1098 = vld [vmem:[%s3 + $0x48] sm:$0xff]
    %v1099 = vld [vmem:[%s3 + $0x50] sm:$0xff]
    %v1100 = vld [vmem:[%s3 + $0x58] sm:$0xff]
    %v1101 = vld [vmem:[%s3 + $0x60] sm:$0xff]
    %v1102 = vld [vmem:[%s3 + $0x68] sm:$0xff]
    %v1103 = vld [vmem:[%s3 + $0x70] sm:$0xff]
    %v1104 = vld [vmem:[%s3 + $0x78] sm:$0xff]
    %v1105 = vld [vmem:[%s4 + $0x7] sm:$0x1]
    %v1107 = vlaneseq
    %v1108 = vshrl.u32 %v1107, 7
    %v1109 = vsub.s32 0, %v1108
    %v1110 = vrot.slane %v1105, %v1109
    %1112 = vmatprep.subr.mxu0 0.0
    %1113 = vmatpush1.msra.mxu0 %v1089
    %1114 = vmatprep.subr.mxu0 0.0
    %1115 = vmatpush1.msra.mxu0 %v1090
    %1116 = vmatprep.subr.mxu0 0.0
    %1117 = vmatpush1.msra.mxu0 %v1091
    %1118 = vmatprep.subr.mxu0 0.0
    %1119 = vmatpush1.msra.mxu0 %v1092
    %1120 = vmatprep.subr.mxu0 0.0
    %1121 = vmatpush1.msra.mxu0 %v1093
    %1122 = vmatprep.subr.mxu0 0.0
    %1123 = vmatpush1.msra.mxu0 %v1094
    %1124 = vmatprep.subr.mxu0 0.0
    %1125 = vmatpush1.msra.mxu0 %v1095
    %1126 = vmatprep.subr.mxu0 0.0
    %1127 = vmatpush1.msra.mxu0 %v1096
    %1128 = vmatprep.subr.mxu0 0.0
    %1129 = vmatpush1.msra.mxu0 %v1097
    %1130 = vmatprep.subr.mxu0 0.0
    %1131 = vmatpush1.msra.mxu0 %v1098
    %1132 = vmatprep.subr.mxu0 0.0
    %1133 = vmatpush1.msra.mxu0 %v1099
    %1134 = vmatprep.subr.mxu0 0.0
    %1135 = vmatpush1.msra.mxu0 %v1100
    %1136 = vmatprep.subr.mxu0 0.0
    %1137 = vmatpush1.msra.mxu0 %v1101
    %1138 = vmatprep.subr.mxu0 0.0
    %1139 = vmatpush1.msra.mxu0 %v1102
    %1140 = vmatprep.subr.mxu0 0.0
    %1141 = vmatpush1.msra.mxu0 %v1103
    %1142 = vmatprep.subr.mxu0 0.0
    %1143 = vmatpush1.msra.mxu0 %v1104
    %1144 = vmatprep.subr.mxu0 0.0
    %1145 = vmatpush1.msra.mxu0 0.0
    %1146 = vmatprep.subr.mxu0 0.0
    %1147 = vmatpush1.msra.mxu0 0.0
    %1148 = vmatprep.subr.mxu0 0.0
    %1149 = vmatpush1.msra.mxu0 0.0
    %1150 = vmatprep.subr.mxu0 0.0
    %1151 = vmatpush1.msra.mxu0 0.0
    %1152 = vmatprep.subr.mxu0 0.0
    %1153 = vmatpush1.msra.mxu0 0.0
    %1154 = vmatprep.subr.mxu0 0.0
    %1155 = vmatpush1.msra.mxu0 0.0
    %1156 = vmatprep.subr.mxu0 0.0
    %1157 = vmatpush1.msra.mxu0 0.0
    %1158 = vmatprep.subr.mxu0 0.0
    %1159 = vmatpush1.msra.mxu0 0.0
    %1160 = vmatprep.subr.mxu0 0.0
    %1161 = vmatpush1.msra.mxu0 0.0
    %1162 = vmatprep.subr.mxu0 0.0
    %1163 = vmatpush1.msra.mxu0 0.0
    %1164 = vmatprep.subr.mxu0 0.0
    %1165 = vmatpush1.msra.mxu0 0.0
    %1166 = vmatprep.subr.mxu0 0.0
    %1167 = vmatpush1.msra.mxu0 0.0
    %1168 = vmatprep.subr.mxu0 0.0
    %1169 = vmatpush1.msra.mxu0 0.0
    %1170 = vmatprep.subr.mxu0 0.0
    %1171 = vmatpush1.msra.mxu0 0.0
    %1172 = vmatprep.subr.mxu0 0.0
    %1173 = vmatpush1.msra.mxu0 0.0
    %1174 = vmatprep.subr.mxu0 0.0
    %1175 = vmatpush1.msra.mxu0 0.0
    %1176 = vmatprep.mubr.f32.mxu0 0.0
    %1177 = vmatmul.mubr.f32.gmra.mrb[0].mxu0 %v1087
    %v1178 = vpop.f32.mrb[0].mxu0
    %v1179 = vadd.f32 %v1110, %v1178
    %v1180 = vpop.f32.mrb[0].mxu0
    %1181 = vmatprep.mubr.f32.mxu0 0.0
    %1182 = vmatmul.mubr.f32.gmra.mrb[0].mxu0 %v1088
    %v1183 = vpop.f32.mrb[0].mxu0
    %v1184 = vadd.f32 %v1110, %v1183
    %v1185 = vpop.f32.mrb[0].mxu0
    %1186 = vdwg.mxu0
    %v1187 = vadd.f32 %v977, %v1179
    %v1188 = vadd.f32 %v978, %v1184
    %v1189 = vld [vmem:[%s4 + $0x8] sm:$0x1]
    %v1190 = vld [vmem:[%s4 + $0x9] sm:$0x1]
    %v1191 = vsel %vm25, %v1187, 0.0
    %1192 = vadd.xlane.f32.xlu0 %v1191
    %v1193 = vpop.xlane.xlu0 %1192
    %v1194 = vsel %vm25, %v1188, 0.0
    %1195 = vadd.xlane.f32.xlu0 %v1194
    %v1196 = vpop.xlane.xlu0 %1195
    %v1197 = vmul.f32 %v1193, %v32
    %v1198 = vmul.f32 %v1196, %v32
    %v1199 = vsub.f32 %v1187, %v1197
    %v1200 = vsub.f32 %v1188, %v1198
    %v1201 = vmul.f32 %v1199, %v1199
    %v1202 = vmul.f32 %v1200, %v1200
    %v1203 = vsel %vm25, %v1201, 0.0
    %1204 = vadd.xlane.f32.xlu0 %v1203
    %v1205 = vpop.xlane.xlu0 %1204
    %v1206 = vsel %vm25, %v1202, 0.0
    %1207 = vadd.xlane.f32.xlu0 %v1206
    %v1208 = vpop.xlane.xlu0 %1207
    %v1209 = vmul.f32 %v1205, %v32
    %v1210 = vmul.f32 %v1208, %v32
    %v1211 = vadd.f32 %v1209, 1e-12
    %v1212 = vadd.f32 %v1210, 1e-12
    %v1213 = vrsqrt.pop %v1211
    %v1214 = vrsqrt.pop %v1212
    %v1215 = vmul.f32 %v1199, %v1213
    %v1216 = vmul.f32 %v1200, %v1214
    %v1218 = vlaneseq
    %v1219 = vshrl.u32 %v1218, 7
    %v1220 = vsub.s32 0, %v1219
    %v1221 = vrot.slane %v1189, %v1220
    %v1223 = vmul.f32 %v1215, %v1221
    %v1224 = vmul.f32 %v1216, %v1221
    %v1226 = vlaneseq
    %v1227 = vshrl.u32 %v1226, 7
    %v1228 = vsub.s32 0, %v1227
    %v1229 = vrot.slane %v1190, %v1228
    %v1231 = vadd.f32 %v1223, %v1229
    %v1232 = vadd.f32 %v1224, %v1229
    %v1234 = vrot.slane %v1232, 7
    %vm1236 = vcmask 1040384
    %v1237 = vsel %vm1236, %v1231, %v1234
    %v1238 = vld [vmem:[%s2 + $0x18] sm:$0xff]
    %v1239 = vld [vmem:[%s2 + $0x40] sm:$0xff]
    %v1240 = vld [vmem:[%s2 + $0x68] sm:$0xff]
    %v1241 = vld [vmem:[%s2 + $0x90] sm:$0xff]
    %v1242 = vld [vmem:[%s4 + $0xa] sm:$0x1]
    %v1244 = vlaneseq
    %v1245 = vshrl.u32 %v1244, 7
    %v1246 = vsub.s32 0, %v1245
    %v1247 = vrot.slane %v1242, %v1246
    %v1250 = vsel %vm25, %v1237, 0
    %1252 = vmatprep.subr.mxu0 0.0
    %1253 = vmatpush1.msra.mxu0 %v1238
    %1254 = vmatprep.subr.mxu0 0.0
    %1255 = vmatpush1.msra.mxu0 %v1239
    %1256 = vmatprep.subr.mxu0 0.0
    %1257 = vmatpush1.msra.mxu0 %v1240
    %1258 = vmatprep.subr.mxu0 0.0
    %1259 = vmatpush1.msra.mxu0 %v1241
    %1260 = vmatprep.subr.mxu0 0.0
    %1261 = vmatpush1.msra.mxu0 0.0
    %1262 = vmatprep.subr.mxu0 0.0
    %1263 = vmatpush1.msra.mxu0 0.0
    %1264 = vmatprep.subr.mxu0 0.0
    %1265 = vmatpush1.msra.mxu0 0.0
    %1266 = vmatprep.subr.mxu0 0.0
    %1267 = vmatpush1.msra.mxu0 0.0
    %1268 = vmatprep.subr.mxu0 0.0
    %1269 = vmatpush1.msra.mxu0 0.0
    %1270 = vmatprep.subr.mxu0 0.0
    %1271 = vmatpush1.msra.mxu0 0.0
    %1272 = vmatprep.subr.mxu0 0.0
    %1273 = vmatpush1.msra.mxu0 0.0
    %1274 = vmatprep.subr.mxu0 0.0
    %1275 = vmatpush1.msra.mxu0 0.0
    %1276 = vmatprep.subr.mxu0 0.0
    %1277 = vmatpush1.msra.mxu0 0.0
    %1278 = vmatprep.subr.mxu0 0.0
    %1279 = vmatpush1.msra.mxu0 0.0
    %1280 = vmatprep.subr.mxu0 0.0
    %1281 = vmatpush1.msra.mxu0 0.0
    %1282 = vmatprep.subr.mxu0 0.0
    %1283 = vmatpush1.msra.mxu0 0.0
    %1284 = vmatprep.subr.mxu0 0.0
    %1285 = vmatpush1.msra.mxu0 0.0
    %1286 = vmatprep.subr.mxu0 0.0
    %1287 = vmatpush1.msra.mxu0 0.0
    %1288 = vmatprep.subr.mxu0 0.0
    %1289 = vmatpush1.msra.mxu0 0.0
    %1290 = vmatprep.subr.mxu0 0.0
    %1291 = vmatpush1.msra.mxu0 0.0
    %1292 = vmatprep.subr.mxu0 0.0
    %1293 = vmatpush1.msra.mxu0 0.0
    %1294 = vmatprep.subr.mxu0 0.0
    %1295 = vmatpush1.msra.mxu0 0.0
    %1296 = vmatprep.subr.mxu0 0.0
    %1297 = vmatpush1.msra.mxu0 0.0
    %1298 = vmatprep.subr.mxu0 0.0
    %1299 = vmatpush1.msra.mxu0 0.0
    %1300 = vmatprep.subr.mxu0 0.0
    %1301 = vmatpush1.msra.mxu0 0.0
    %1302 = vmatprep.subr.mxu0 0.0
    %1303 = vmatpush1.msra.mxu0 0.0
    %1304 = vmatprep.subr.mxu0 0.0
    %1305 = vmatpush1.msra.mxu0 0.0
    %1306 = vmatprep.subr.mxu0 0.0
    %1307 = vmatpush1.msra.mxu0 0.0
    %1308 = vmatprep.subr.mxu0 0.0
    %1309 = vmatpush1.msra.mxu0 0.0
    %1310 = vmatprep.subr.mxu0 0.0
    %1311 = vmatpush1.msra.mxu0 0.0
    %1312 = vmatprep.subr.mxu0 0.0
    %1313 = vmatpush1.msra.mxu0 0.0
    %1314 = vmatprep.subr.mxu0 0.0
    %1315 = vmatpush1.msra.mxu0 0.0
    %1316 = vmatprep.mubr.f32.mxu0 0.0
    %1317 = vmatmul.mubr.f32.gmra.mrb[0].mxu0 %v1250
    %v1318 = vpop.f32.mrb[0].mxu0
    %v1319 = vadd.f32 %v1247, %v1318
    %v1320 = vpop.f32.mrb[0].mxu0
    %1321 = vdwg.mxu0
    %v1322 = vtanh.pop %v1319
    %v1323 = vld [vmem:[%s2 + $0x20] sm:$0xff]
    %v1324 = vld [vmem:[%s2 + $0x48] sm:$0xff]
    %v1325 = vld [vmem:[%s2 + $0x70] sm:$0xff]
    %v1326 = vld [vmem:[%s2 + $0x98] sm:$0xff]
    %v1327 = vld [vmem:[%s4 + $0xb] sm:$0x1]
    %v1329 = vlaneseq
    %v1330 = vshrl.u32 %v1329, 7
    %v1331 = vsub.s32 0, %v1330
    %v1332 = vrot.slane %v1327, %v1331
    %v1335 = vsel %vm25, %v1322, 0
    %1337 = vmatprep.subr.mxu0 0.0
    %1338 = vmatpush1.msra.mxu0 %v1323
    %1339 = vmatprep.subr.mxu0 0.0
    %1340 = vmatpush1.msra.mxu0 %v1324
    %1341 = vmatprep.subr.mxu0 0.0
    %1342 = vmatpush1.msra.mxu0 %v1325
    %1343 = vmatprep.subr.mxu0 0.0
    %1344 = vmatpush1.msra.mxu0 %v1326
    %1345 = vmatprep.subr.mxu0 0.0
    %1346 = vmatpush1.msra.mxu0 0.0
    %1347 = vmatprep.subr.mxu0 0.0
    %1348 = vmatpush1.msra.mxu0 0.0
    %1349 = vmatprep.subr.mxu0 0.0
    %1350 = vmatpush1.msra.mxu0 0.0
    %1351 = vmatprep.subr.mxu0 0.0
    %1352 = vmatpush1.msra.mxu0 0.0
    %1353 = vmatprep.subr.mxu0 0.0
    %1354 = vmatpush1.msra.mxu0 0.0
    %1355 = vmatprep.subr.mxu0 0.0
    %1356 = vmatpush1.msra.mxu0 0.0
    %1357 = vmatprep.subr.mxu0 0.0
    %1358 = vmatpush1.msra.mxu0 0.0
    %1359 = vmatprep.subr.mxu0 0.0
    %1360 = vmatpush1.msra.mxu0 0.0
    %1361 = vmatprep.subr.mxu0 0.0
    %1362 = vmatpush1.msra.mxu0 0.0
    %1363 = vmatprep.subr.mxu0 0.0
    %1364 = vmatpush1.msra.mxu0 0.0
    %1365 = vmatprep.subr.mxu0 0.0
    %1366 = vmatpush1.msra.mxu0 0.0
    %1367 = vmatprep.subr.mxu0 0.0
    %1368 = vmatpush1.msra.mxu0 0.0
    %1369 = vmatprep.subr.mxu0 0.0
    %1370 = vmatpush1.msra.mxu0 0.0
    %1371 = vmatprep.subr.mxu0 0.0
    %1372 = vmatpush1.msra.mxu0 0.0
    %1373 = vmatprep.subr.mxu0 0.0
    %1374 = vmatpush1.msra.mxu0 0.0
    %1375 = vmatprep.subr.mxu0 0.0
    %1376 = vmatpush1.msra.mxu0 0.0
    %1377 = vmatprep.subr.mxu0 0.0
    %1378 = vmatpush1.msra.mxu0 0.0
    %1379 = vmatprep.subr.mxu0 0.0
    %1380 = vmatpush1.msra.mxu0 0.0
    %1381 = vmatprep.subr.mxu0 0.0
    %1382 = vmatpush1.msra.mxu0 0.0
    %1383 = vmatprep.subr.mxu0 0.0
    %1384 = vmatpush1.msra.mxu0 0.0
    %1385 = vmatprep.subr.mxu0 0.0
    %1386 = vmatpush1.msra.mxu0 0.0
    %1387 = vmatprep.subr.mxu0 0.0
    %1388 = vmatpush1.msra.mxu0 0.0
    %1389 = vmatprep.subr.mxu0 0.0
    %1390 = vmatpush1.msra.mxu0 0.0
    %1391 = vmatprep.subr.mxu0 0.0
    %1392 = vmatpush1.msra.mxu0 0.0
    %1393 = vmatprep.subr.mxu0 0.0
    %1394 = vmatpush1.msra.mxu0 0.0
    %1395 = vmatprep.subr.mxu0 0.0
    %1396 = vmatpush1.msra.mxu0 0.0
    %1397 = vmatprep.subr.mxu0 0.0
    %1398 = vmatpush1.msra.mxu0 0.0
    %1399 = vmatprep.subr.mxu0 0.0
    %1400 = vmatpush1.msra.mxu0 0.0
    %1401 = vmatprep.mubr.f32.mxu0 0.0
    %1402 = vmatmul.mubr.f32.gmra.mrb[0].mxu0 %v1335
    %v1403 = vpop.f32.mrb[0].mxu0
    %v1404 = vadd.f32 %v1332, %v1403
    %v1405 = vpop.f32.mrb[0].mxu0
    %1406 = vdwg.mxu0
    %1407 = vst [vmem:[#allocation2] sm:$0x3] %v1404
    // Predicated region
    $region22: #{bert_classifier_forward.1} parent=1 // pred_check
      _
    $region23: #{bert_classifier_forward.1} parent=1 // pred_check_branch
      %1409 = sbr.rel (0) target = $region25
    $region24: #{bert_classifier_forward.1} parent=1 // pred_region
      %s1411 = ssub.s32 32, 32
      %1412 = vsyncadd [#allocation3], %s1411
      %s1414 = sshll.u32 [#allocation2], 4
      %s1415 = int_to_ptr.vmem [resolvable:$true] %s1414
      %1417 = dma.vmem_to_hbm [thread:$0]  %s1415, 32, %s5, [#allocation3]
    $region25: #{bert_classifier_forward.1} parent=1 // pred_fallthru
      _
    // Predicated region
    $region26: #{bert_classifier_forward.1} parent=1 // pred_check
      _
    $region27: #{bert_classifier_forward.1} parent=1 // pred_check_branch
      %1419 = sbr.rel (0) target = $region29
    $region28: #{bert_classifier_forward.1} parent=1 // pred_region
      %1420 = dma.done [#allocation3], 32
    $region29: #{bert_classifier_forward.1} parent=1 // pred_fallthru
      _
    %1421 = vsyncpa [#allocation3], 1

</llo_original>
